<compile_context>
chip_gen: v7x
topology: tpu7x:2x2x1
jax: 0.10.0
libtpu: 0.0.40
codegen_flags: <defaults>
</compile_context>

<pallas_src>
import functools

import jax
import jax.numpy as jnp
from jax import lax
from jax.experimental import pallas as pl
from jax.experimental.pallas import tpu as pltpu

_MIB = 1024 * 1024


# ---------------------------------------------------------------------------
# Small helpers
# ---------------------------------------------------------------------------

def _round_up(x, m):
    return ((x + m - 1) // m) * m


def _pad2(x, rows, cols):
    r, c = x.shape
    return jnp.pad(x, ((0, rows - r), (0, cols - c)))


def _vmem_capacity_bytes():
    try:
        info = pltpu.get_tpu_info()
        cap = getattr(info, "vmem_capacity_bytes", None)
        if cap:
            return int(cap)
    except Exception:
        pass
    return 64 * _MIB          # conservative fallback (v7x-sized)


def _vmem_budget_bytes():
    # Largest per-call working set we target; keeps headroom on every generation
    # (v7x has only 64 MiB physical VMEM per TensorCore).
    return min(_vmem_capacity_bytes() // 2, 64 * _MIB)


def _compiler_params(sem, footprint):
    cap = _vmem_capacity_bytes()
    limit = int(min(int(cap * 0.9), max(32 * _MIB, 2 * int(footprint))))
    return pltpu.CompilerParams(dimension_semantics=sem, vmem_limit_bytes=limit)


def _select_layer_tiles(np_, f_max, fi_p, fo_p, out_itemsize, budget):
    """Largest (row tile tm, neighbor tile tk) whose working set fits the budget."""
    def footprint(tm, tk):
        return (2 * tm * tk                     # int8 A_hat tiles, double buffered
                + 2 * tk * f_max * 2            # X / Y neighbor tiles (bf16)
                + 2 * tm * f_max * out_itemsize  # output tiles
                + 2 * fi_p * fo_p * 2           # resident W^T
                + tm * f_max * 4                # f32 accumulator scratch
                + 2 * _MIB)                     # dinv / bias / misc headroom
    tm_cands = [t for t in (1024, 512, 256, 128) if np_ % t == 0] or [np_]
    tk_cands = [t for t in (2048, 1024, 512, 256, 128) if np_ % t == 0] or [np_]
    for tm in tm_cands:        # bigger tm first: fewer X re-reads from HBM
        for tk in tk_cands:    # then bigger tk: fewer grid steps
            if footprint(tm, tk) <= budget:
                return tm, tk, footprint(tm, tk)
    tm, tk = tm_cands[-1], tk_cands[-1]
    return tm, tk, footprint(tm, tk)


# ---------------------------------------------------------------------------
# Kernel 1 (once per forward, cached=True): fused fill_diag + degree.
#   A_hat (int8, 1 B/elt) and deg are produced in a single pass over adj.
# ---------------------------------------------------------------------------

def _prep_kernel(adj_ref, ah_ref, deg_ref, *, n):
    i = pl.program_id(0)
    k = pl.program_id(1)
    tm, tk = ah_ref.shape
    row = i * tm + lax.broadcasted_iota(jnp.int32, (tm, tk), 0)
    col = k * tk + lax.broadcasted_iota(jnp.int32, (tm, tk), 1)
    a = jnp.logical_or(adj_ref[...] != 0.0,
                       jnp.logical_and(row == col, row < n))   # fill_diag(adj, 1)
    a_f = a.astype(jnp.float32)
    ah_ref[...] = a_f.astype(jnp.int8)

    @pl.when(k == 0)
    def _():
        deg_ref[...] = jnp.zeros_like(deg_ref)

    deg_ref[...] += jnp.sum(a_f, axis=1, keepdims=True)


def gcn_prepare_adj(adj_pad, n):
    """Returns (A_hat int8 [Np,Np], dinv f32 [Np,1]) — the cached GCN norm split
    so that only 1 byte/element of adjacency is streamed by the layer kernels."""
    np_ = adj_pad.shape[0]
    budget = _vmem_budget_bytes()
    tm = next(t for t in (512, 256, 128) if np_ % t == 0)
    tk = next(t for t in (1024, 512, 256, 128) if np_ % t == 0)
    while 2 * tm * tk * 5 + 2 * _MIB > budget and tk > 128:
        tk //= 2
    footprint = 2 * tm * tk * 5 + 2 * _MIB

    a_hat, deg = pl.pallas_call(
        functools.partial(_prep_kernel, n=n),
        out_shape=(jax.ShapeDtypeStruct((np_, np_), jnp.int8),
                   jax.ShapeDtypeStruct((np_, 1), jnp.float32)),
        grid_spec=pltpu.PrefetchScalarGridSpec(
            num_scalar_prefetch=0,
            grid=(np_ // tm, np_ // tk),
            in_specs=[pl.BlockSpec((tm, tk), lambda i, k: (i, k))],
            out_specs=(pl.BlockSpec((tm, tk), lambda i, k: (i, k)),
                       pl.BlockSpec((tm, 1), lambda i, k: (i, 0))),
        ),
        compiler_params=_compiler_params(("parallel", "arbitrary"), footprint),
        cost_estimate=pl.CostEstimate(flops=2 * np_ * np_, transcendentals=0,
                                      bytes_accessed=np_ * np_ * 5 + np_ * 8),
    )(adj_pad)
    dinv = jnp.where(deg > 0.0, lax.rsqrt(deg), 0.0)
    return a_hat, dinv


# ---------------------------------------------------------------------------
# Kernel 2: one GCNConv layer, tiled.  Two variants by padded feature widths.
#   out = dinv_row * (A_hat @ (dinv_col * X)) @ W^T + b      (Fi_p <= Fo_p)
#   out = dinv_row * (A_hat @ ((dinv_col * X) @ W^T)) + b    (Fi_p >  Fo_p)
# ---------------------------------------------------------------------------

def _gcn_layer_kernel_agg_first(ah_ref, x_ref, dcol_ref, drow_ref, wt_ref, b_ref,
                                o_ref, acc_ref, *, apply_relu):
    k = pl.program_id(1)

    @pl.when(k == 0)
    def _():
        acc_ref[...] = jnp.zeros_like(acc_ref)

    a_bf = ah_ref[...].astype(jnp.bfloat16)                       # binary -> exact
    xs = (x_ref[...].astype(jnp.float32) * dcol_ref[...]).astype(jnp.bfloat16)
    acc_ref[...] += jnp.dot(a_bf, xs, preferred_element_type=jnp.float32)

    @pl.when(k == pl.num_programs(1) - 1)
    def _():
        agg = acc_ref[...] * drow_ref[...]
        out = jnp.dot(agg.astype(jnp.bfloat16), wt_ref[...],
                      preferred_element_type=jnp.float32) + b_ref[...]
        if apply_relu:
            out = jnp.maximum(out, 0.0)
        o_ref[...] = out.astype(o_ref.dtype)


def _proj_kernel(x_ref, d_ref, wt_ref, o_ref):
    xs = (x_ref[...].astype(jnp.float32) * d_ref[...]).astype(jnp.bfloat16)
    o_ref[...] = jnp.dot(xs, wt_ref[...],
                         preferred_element_type=jnp.float32).astype(o_ref.dtype)


def _gcn_layer_kernel_proj_first(ah_ref, y_ref, drow_ref, b_ref,
                                 o_ref, acc_ref, *, apply_relu):
    k = pl.program_id(1)

    @pl.when(k == 0)
    def _():
        acc_ref[...] = jnp.zeros_like(acc_ref)

    acc_ref[...] += jnp.dot(ah_ref[...].astype(jnp.bfloat16), y_ref[...],
                            preferred_element_type=jnp.float32)

    @pl.when(k == pl.num_programs(1) - 1)
    def _():
        out = acc_ref[...] * drow_ref[...] + b_ref[...]
        if apply_relu:
            out = jnp.maximum(out, 0.0)
        o_ref[...] = out.astype(o_ref.dtype)


def gcn_conv_tiled(a_hat, dinv, h, wt, b, *, apply_relu, out_dtype):
    np_ = a_hat.shape[0]
    fi_p, fo_p = wt.shape
    out_itemsize = jnp.dtype(out_dtype).itemsize
    budget = _vmem_budget_bytes()
    f_max = max(fi_p, fo_p)
    tm, tk, footprint = _select_layer_tiles(np_, f_max, fi_p, fo_p,
                                            max(out_itemsize, 4), budget)
    grid = (np_ // tm, np_ // tk)
    n_row_tiles = np_ // tm

    if fi_p <= fo_p:
        # Aggregate with the narrow Fi first, then project.
        flops = 2 * np_ * np_ * fi_p + 2 * np_ * fi_p * fo_p
        bytes_accessed = int(np_ * np_
                             + n_row_tiles * (np_ * fi_p * 2 + np_ * 4
                                              + fi_p * fo_p * 2 + fo_p * 4)
                             + np_ * fo_p * out_itemsize)
        kernel = functools.partial(_gcn_layer_kernel_agg_first, apply_relu=apply_relu)
        return pl.pallas_call(
            kernel,
            out_shape=jax.ShapeDtypeStruct((np_, fo_p), out_dtype),
            grid_spec=pltpu.PrefetchScalarGridSpec(
                num_scalar_prefetch=0,
                grid=grid,
                in_specs=[
                    pl.BlockSpec((tm, tk), lambda i, k: (i, k)),      # A_hat (int8)
                    pl.BlockSpec((tk, fi_p), lambda i, k: (k, 0)),    # X rows (bf16)
                    pl.BlockSpec((tk, 1), lambda i, k: (k, 0)),       # dinv (cols)
                    pl.BlockSpec((tm, 1), lambda i, k: (i, 0)),       # dinv (rows)
                    pl.BlockSpec((fi_p, fo_p), lambda i, k: (0, 0)),  # W^T (resident)
                    pl.BlockSpec((1, fo_p), lambda i, k: (0, 0)),     # bias
                ],
                out_specs=pl.BlockSpec((tm, fo_p), lambda i, k: (i, 0)),
                scratch_shapes=[pltpu.VMEM((tm, fi_p), jnp.float32)],
            ),
            compiler_params=_compiler_params(("parallel", "arbitrary"), footprint),
            cost_estimate=pl.CostEstimate(flops=flops, transcendentals=0,
                                          bytes_accessed=bytes_accessed),
        )(a_hat, h, dinv, dinv, wt, b)

    # Fi_p > Fo_p: project first (PyG order), aggregate the narrow Fo.
    tm_p = next(t for t in (1024, 512, 256, 128) if np_ % t == 0)
    while tm_p > 128 and (2 * tm_p * (fi_p + fo_p) * 2
                          + 2 * fi_p * fo_p * 2 + 2 * _MIB) > budget:
        tm_p //= 2
    proj_fp = 2 * tm_p * (fi_p + fo_p) * 2 + 2 * fi_p * fo_p * 2 + 2 * _MIB
    y = pl.pallas_call(
        _proj_kernel,
        out_shape=jax.ShapeDtypeStruct((np_, fo_p), jnp.bfloat16),
        grid_spec=pltpu.PrefetchScalarGridSpec(
            num_scalar_prefetch=0,
            grid=(np_ // tm_p,),
            in_specs=[
                pl.BlockSpec((tm_p, fi_p), lambda i: (i, 0)),
                pl.BlockSpec((tm_p, 1), lambda i: (i, 0)),
                pl.BlockSpec((fi_p, fo_p), lambda i: (0, 0)),
            ],
            out_specs=pl.BlockSpec((tm_p, fo_p), lambda i: (i, 0)),
        ),
        compiler_params=_compiler_params(("parallel",), proj_fp),
        cost_estimate=pl.CostEstimate(
            flops=2 * np_ * fi_p * fo_p, transcendentals=0,
            bytes_accessed=int(np_ * fi_p * 2 + np_ * fo_p * 2 + fi_p * fo_p * 2)),
    )(h, dinv, wt)

    flops = 2 * np_ * np_ * fo_p
    bytes_accessed = int(np_ * np_ + n_row_tiles * (np_ * fo_p * 2 + fo_p * 4)
                         + np_ * fo_p * out_itemsize)
    kernel = functools.partial(_gcn_layer_kernel_proj_first, apply_relu=apply_relu)
    return pl.pallas_call(
        kernel,
        out_shape=jax.ShapeDtypeStruct((np_, fo_p), out_dtype),
        grid_spec=pltpu.PrefetchScalarGridSpec(
            num_scalar_prefetch=0,
            grid=grid,
            in_specs=[
                pl.BlockSpec((tm, tk), lambda i, k: (i, k)),     # A_hat (int8)
                pl.BlockSpec((tk, fo_p), lambda i, k: (k, 0)),   # Y = (dinv*X) @ W^T
                pl.BlockSpec((tm, 1), lambda i, k: (i, 0)),      # dinv (rows)
                pl.BlockSpec((1, fo_p), lambda i, k: (0, 0)),    # bias
            ],
            out_specs=pl.BlockSpec((tm, fo_p), lambda i, k: (i, 0)),
            scratch_shapes=[pltpu.VMEM((tm, fo_p), jnp.float32)],
        ),
        compiler_params=_compiler_params(("parallel", "arbitrary"), footprint),
        cost_estimate=pl.CostEstimate(flops=flops, transcendentals=0,
                                      bytes_accessed=bytes_accessed),
    )(a_hat, y, dinv, b)


# ---------------------------------------------------------------------------
# Kernel 3: small-graph fast path — all layers + normalization fused into one
# single-tile kernel (everything stays in VMEM, no intermediate HBM traffic).
# ---------------------------------------------------------------------------

def _fused_small_kernel(adj_ref, x_ref, *refs, n, num_layers):
    o_ref = refs[-1]
    np_ = adj_ref.shape[0]
    row = lax.broadcasted_iota(jnp.int32, (np_, np_), 0)
    col = lax.broadcasted_iota(jnp.int32, (np_, np_), 1)
    a_hat = jnp.logical_or(adj_ref[...] != 0.0,
                           jnp.logical_and(row == col, row < n)).astype(jnp.float32)
    deg = jnp.sum(a_hat, axis=1, keepdims=True)
    dinv = jnp.where(deg > 0.0, lax.rsqrt(deg), 0.0)
    a_bf = a_hat.astype(jnp.bfloat16)

    h = x_ref[...].astype(jnp.float32)
    for li in range(num_layers):
        wt = refs[2 * li][...]                     # (fi_p, fo_p) bf16 (= W^T)
        bias = refs[2 * li + 1][...]               # (1, fo_p) f32
        xs = (h * dinv).astype(jnp.bfloat16)       # fold D^{-1/2} (columns)
        y = jnp.dot(xs, wt, preferred_element_type=jnp.float32)
        agg = jnp.dot(a_bf, y.astype(jnp.bfloat16),
                      preferred_element_type=jnp.float32)
        h = agg * dinv + bias                      # fold D^{-1/2} (rows) + bias
        if li < num_layers - 1:
            h = jnp.maximum(h, 0.0)                # F.relu; dropout is identity (eval)
    o_ref[...] = h.astype(o_ref.dtype)


def gcn_forward_fused_small(layers, adj_pad, x_pad, n):
    np_ = adj_pad.shape[0]
    num_layers = len(layers)
    fo_last_p = layers[-1]["wt"].shape[1]
    wb = []
    for layer in layers:
        wb += [layer["wt"], layer["b"]]
    f_max = max(max(l["wt"].shape) for l in layers)
    footprint = (np_ * np_ * 6 + 4 * np_ * f_max * 4
                 + sum(int(l["wt"].size) * 2 + int(l["b"].size) * 4 for l in layers)
                 + 4 * _MIB)
    flops = sum(2 * np_ * np_ * l["wt"].shape[1]
                + 2 * np_ * l["wt"].shape[0] * l["wt"].shape[1] for l in layers)
    bytes_accessed = int(np_ * np_ * 4 + int(x_pad.size) * 4 + np_ * fo_last_p * 4
                         + sum(int(l["wt"].size) * 2 for l in layers))
    kernel = functools.partial(_fused_small_kernel, n=n, num_layers=num_layers)
    return pl.pallas_call(
        kernel,
        out_shape=jax.ShapeDtypeStruct((np_, fo_last_p), jnp.float32),
        compiler_params=_compiler_params(None, footprint),
        cost_estimate=pl.CostEstimate(flops=flops, transcendentals=0,
                                      bytes_accessed=bytes_accessed),
    )(adj_pad, x_pad, *wb)


# ---------------------------------------------------------------------------
# Parameters (pre-transposed W^T, pre-padded, bf16; zero bias like PyG reset)
# ---------------------------------------------------------------------------

def init_gcn_params(key, in_channels, hidden_channels, out_channels, num_layers):
    dims = [in_channels] + [hidden_channels] * (num_layers - 1) + [out_channels]
    keys = jax.random.split(key, num_layers)
    layers = []
    for li in range(num_layers):
        fin, fout = dims[li], dims[li + 1]
        fin_p, fout_p = _round_up(fin, 128), _round_up(fout, 128)
        s = (6.0 / (fin + fout)) ** 0.5                         # glorot-uniform bound
        wt = jax.random.uniform(keys[li], (fin, fout), jnp.float32, -s, s)   # = W^T
        wt_p = jnp.zeros((fin_p, fout_p), jnp.float32).at[:fin, :fout].set(wt)
        layers.append({
            "wt": wt_p.astype(jnp.bfloat16),
            "b": jnp.zeros((1, fout_p), jnp.float32),
            "fin": fin,
            "fout": fout,
        })
    return layers


# ---------------------------------------------------------------------------
# Forward:  GCN.forward(x, adj_t, use_counts=False, counts=None), inference mode
# ---------------------------------------------------------------------------

def gcn_forward(layers, x, adj, use_counts=False, counts=None, *,
                small_graph_max_np=1024):
    if use_counts:
        # TODO(synk): PositionalEncoding / counts-concat branch not defined in reference.
        raise NotImplementedError("use_counts=True branch is not implemented")

    n = x.shape[0]
    np_ = _round_up(max(n, 8), 128)
    assert np_ % 128 == 0
    fin0 = layers[0]["fin"]
    fin0_p = layers[0]["wt"].shape[0]
    fout_last = layers[-1]["fout"]
    adj_pad = _pad2(adj.astype(jnp.float32), np_, np_)

    budget = _vmem_budget_bytes()
    f_max = max(max(l["wt"].shape) for l in layers)
    fused_fp = np_ * np_ * 6 + 4 * np_ * f_max * 4 + 8 * _MIB
    if np_ <= small_graph_max_np and fused_fp <= budget:
        x_pad = jnp.zeros((np_, fin0_p), jnp.float32).at[:n, :fin0].set(
            x.astype(jnp.float32))
        out = gcn_forward_fused_small(layers, adj_pad, x_pad, n)
        return out[:n, :fout_last]

    # Tiled path: cached normalization products computed once, reused per layer.
    a_hat, dinv = gcn_prepare_adj(adj_pad, n)
    h = jnp.zeros((np_, fin0_p), jnp.bfloat16).at[:n, :fin0].set(
        x.astype(jnp.bfloat16))
    num_layers = len(layers)
    for li, layer in enumerate(layers):
        last = li == num_layers - 1
        h = gcn_conv_tiled(a_hat, dinv, h, layer["wt"], layer["b"],
                           apply_relu=not last,                  # F.relu fused
                           out_dtype=jnp.float32 if last else jnp.bfloat16)
        # F.dropout(training=False) == identity
    return h[:n, :fout_last]


# ---------------------------------------------------------------------------
# Pure-JAX reference (f32) for validation
# ---------------------------------------------------------------------------

def _gcn_reference(layers, x, adj):
    n = x.shape[0]
    a_hat = jnp.where(jnp.eye(n, dtype=bool), 1.0, (adj != 0).astype(jnp.float32))
    deg = jnp.sum(a_hat, axis=1)
    dinv = jnp.where(deg > 0, 1.0 / jnp.sqrt(deg), 0.0)
    anorm = dinv[:, None] * a_hat * dinv[None, :]
    h = x.astype(jnp.float32)
    for li, layer in enumerate(layers):
        fin, fout = layer["fin"], layer["fout"]
        w = layer["wt"][:fin, :fout].astype(jnp.float32)
        b = layer["b"][0, :fout]
        h = anorm @ (h @ w) + b
        if li < len(layers) - 1:
            h = jnp.maximum(h, 0.0)
    return h


# ---------------------------------------------------------------------------
# Driver
# ---------------------------------------------------------------------------

def _run_case(key, n, in_c, hid_c, out_c, num_layers, density, small_graph_max_np):
    k_x, k_adj, k_par = jax.random.split(key, 3)
    x = jax.random.normal(k_x, (n, in_c), dtype=jnp.float32)
    a = (jax.random.uniform(k_adj, (n, n)) < density).astype(jnp.float32)
    adj = jnp.maximum(a, a.T)                       # symmetric binary adjacency
    layers = init_gcn_params(k_par, in_c, hid_c, out_c, num_layers)

    out = gcn_forward(layers, x, adj, small_graph_max_np=small_graph_max_np)
    out = jax.block_until_ready(out)
    assert out.shape == (n, out_c), out.shape
    assert bool(jnp.all(jnp.isfinite(out)))

    ref = _gcn_reference(layers, x, adj)
    err = float(jnp.max(jnp.abs(out - ref)))
    tol = 0.05 + 0.05 * float(jnp.max(jnp.abs(ref)))   # bf16 MXU path tolerance
    assert err <= tol, (err, tol)
    return out


if __name__ == "__main__":
    key = jax.random.PRNGKey(0)
    k1, k2 = jax.random.split(key)
    # Small graph -> fused single-kernel fast path (whole problem in VMEM).
    _run_case(k1, n=64, in_c=16, hid_c=64, out_c=16, num_layers=3,
              density=0.1, small_graph_max_np=1024)
    # Slightly larger graph, forced through the tiled path so that the prep
    # kernel and both per-layer orderings (agg-first and proj-first) are exercised.
    _run_case(k2, n=384, in_c=16, hid_c=256, out_c=16, num_layers=3,
              density=0.05, small_graph_max_np=0)
    print("KERNEL_OK")
</pallas_src>

<mosaic_0001>
module attributes {stable_mosaic.version = 11 : i64} {
  func.func @_fused_small_kernel(%arg0: memref<128x128xf32, #tpu.memory_space<vmem>>, %arg1: memref<128x128xf32, #tpu.memory_space<vmem>>, %arg2: memref<128x128xbf16, #tpu.memory_space<vmem>>, %arg3: memref<1x128xf32, #tpu.memory_space<vmem>>, %arg4: memref<128x128xbf16, #tpu.memory_space<vmem>>, %arg5: memref<1x128xf32, #tpu.memory_space<vmem>>, %arg6: memref<128x128xbf16, #tpu.memory_space<vmem>>, %arg7: memref<1x128xf32, #tpu.memory_space<vmem>>, %arg8: memref<128x128xf32, #tpu.memory_space<vmem>>) attributes {dimension_semantics = [], scalar_prefetch = 0 : i64, scratch_operands = 0 : i64, tpu.core_type = #tpu.core_type<tc>} {
    %0 = tpu.iota {dimensions = array<i32: 0>} : vector<128x128xi32>
    %1 = tpu.iota {dimensions = array<i32: 1>} : vector<128x128xi32>
    %c0 = arith.constant 0 : index
    %c0_0 = arith.constant 0 : index
    %2 = vector.load %arg0[%c0, %c0_0] : memref<128x128xf32, #tpu.memory_space<vmem>>, vector<128x128xf32>
    %cst = arith.constant 0.000000e+00 : f32
    %3 = vector.broadcast %cst : f32 to vector<128x128xf32>
    %4 = arith.cmpf one, %2, %3 : vector<128x128xf32>
    %5 = arith.cmpi eq, %0, %1 : vector<128x128xi32>
    %c64_i32 = arith.constant 64 : i32
    %6 = vector.broadcast %c64_i32 : i32 to vector<128x128xi32>
    %7 = arith.cmpi slt, %0, %6 : vector<128x128xi32>
    %8 = arith.andi %5, %7 : vector<128x128xi1>
    %9 = arith.ori %4, %8 : vector<128x128xi1>
    %10 = arith.extui %9 : vector<128x128xi1> to vector<128x128xi32>
    %11 = arith.sitofp %10 : vector<128x128xi32> to vector<128x128xf32>
    %cst_1 = arith.constant dense<0.000000e+00> : vector<128xf32>
    %12 = vector.multi_reduction <add>, %11, %cst_1 [1] : vector<128x128xf32> to vector<128xf32>
    %13 = vector.shape_cast %12 : vector<128xf32> to vector<128x1xf32>
    %cst_2 = arith.constant 0.000000e+00 : f32
    %14 = vector.broadcast %cst_2 : f32 to vector<128x1xf32>
    %15 = arith.cmpf ogt, %13, %14 : vector<128x1xf32>
    %16 = math.rsqrt %13 : vector<128x1xf32>
    %cst_3 = arith.constant 0.000000e+00 : f32
    %17 = vector.broadcast %cst_3 : f32 to vector<128x1xf32>
    %18 = arith.select %15, %16, %17 : vector<128x1xi1>, vector<128x1xf32>
    %19 = arith.truncf %11 : vector<128x128xf32> to vector<128x128xbf16>
    %c0_4 = arith.constant 0 : index
    %c0_5 = arith.constant 0 : index
    %20 = vector.load %arg1[%c0_4, %c0_5] : memref<128x128xf32, #tpu.memory_space<vmem>>, vector<128x128xf32>
    %c0_6 = arith.constant 0 : index
    %c0_7 = arith.constant 0 : index
    %21 = vector.load %arg2[%c0_6, %c0_7] : memref<128x128xbf16, #tpu.memory_space<vmem>>, vector<128x128xbf16>
    %c0_8 = arith.constant 0 : index
    %c0_9 = arith.constant 0 : index
    %22 = vector.load %arg3[%c0_8, %c0_9] : memref<1x128xf32, #tpu.memory_space<vmem>>, vector<1x128xf32>
    %23 = vector.broadcast %18 : vector<128x1xf32> to vector<128x128xf32>
    %24 = arith.mulf %20, %23 : vector<128x128xf32>
    %25 = arith.truncf %24 : vector<128x128xf32> to vector<128x128xbf16>
    %cst_10 = arith.constant dense<0.000000e+00> : vector<128x128xf32>
    %26 = tpu.matmul %25, %21, %cst_10 {dimension_numbers = #tpu.dot_dimension_numbers<[1], [0], [0], [1], [0, 0, 1, 1], [], []>} : vector<128x128xbf16>, vector<128x128xbf16>, vector<128x128xf32> -> vector<128x128xf32>
    %27 = arith.truncf %26 : vector<128x128xf32> to vector<128x128xbf16>
    %cst_11 = arith.constant dense<0.000000e+00> : vector<128x128xf32>
    %28 = tpu.matmul %19, %27, %cst_11 {dimension_numbers = #tpu.dot_dimension_numbers<[1], [0], [0], [1], [0, 0, 1, 1], [], []>} : vector<128x128xbf16>, vector<128x128xbf16>, vector<128x128xf32> -> vector<128x128xf32>
    %29 = vector.broadcast %18 : vector<128x1xf32> to vector<128x128xf32>
    %30 = arith.mulf %28, %29 : vector<128x128xf32>
    %31 = vector.broadcast %22 : vector<1x128xf32> to vector<128x128xf32>
    %32 = arith.addf %30, %31 : vector<128x128xf32>
    %cst_12 = arith.constant 0.000000e+00 : f32
    %33 = vector.broadcast %cst_12 : f32 to vector<128x128xf32>
    %34 = arith.maximumf %32, %33 : vector<128x128xf32>
    %c0_13 = arith.constant 0 : index
    %c0_14 = arith.constant 0 : index
    %35 = vector.load %arg4[%c0_13, %c0_14] : memref<128x128xbf16, #tpu.memory_space<vmem>>, vector<128x128xbf16>
    %c0_15 = arith.constant 0 : index
    %c0_16 = arith.constant 0 : index
    %36 = vector.load %arg5[%c0_15, %c0_16] : memref<1x128xf32, #tpu.memory_space<vmem>>, vector<1x128xf32>
    %37 = vector.broadcast %18 : vector<128x1xf32> to vector<128x128xf32>
    %38 = arith.mulf %34, %37 : vector<128x128xf32>
    %39 = arith.truncf %38 : vector<128x128xf32> to vector<128x128xbf16>
    %cst_17 = arith.constant dense<0.000000e+00> : vector<128x128xf32>
    %40 = tpu.matmul %39, %35, %cst_17 {dimension_numbers = #tpu.dot_dimension_numbers<[1], [0], [0], [1], [0, 0, 1, 1], [], []>} : vector<128x128xbf16>, vector<128x128xbf16>, vector<128x128xf32> -> vector<128x128xf32>
    %41 = arith.truncf %40 : vector<128x128xf32> to vector<128x128xbf16>
    %cst_18 = arith.constant dense<0.000000e+00> : vector<128x128xf32>
    %42 = tpu.matmul %19, %41, %cst_18 {dimension_numbers = #tpu.dot_dimension_numbers<[1], [0], [0], [1], [0, 0, 1, 1], [], []>} : vector<128x128xbf16>, vector<128x128xbf16>, vector<128x128xf32> -> vector<128x128xf32>
    %43 = vector.broadcast %18 : vector<128x1xf32> to vector<128x128xf32>
    %44 = arith.mulf %42, %43 : vector<128x128xf32>
    %45 = vector.broadcast %36 : vector<1x128xf32> to vector<128x128xf32>
    %46 = arith.addf %44, %45 : vector<128x128xf32>
    %cst_19 = arith.constant 0.000000e+00 : f32
    %47 = vector.broadcast %cst_19 : f32 to vector<128x128xf32>
    %48 = arith.maximumf %46, %47 : vector<128x128xf32>
    %c0_20 = arith.constant 0 : index
    %c0_21 = arith.constant 0 : index
    %49 = vector.load %arg6[%c0_20, %c0_21] : memref<128x128xbf16, #tpu.memory_space<vmem>>, vector<128x128xbf16>
    %c0_22 = arith.constant 0 : index
    %c0_23 = arith.constant 0 : index
    %50 = vector.load %arg7[%c0_22, %c0_23] : memref<1x128xf32, #tpu.memory_space<vmem>>, vector<1x128xf32>
    %51 = vector.broadcast %18 : vector<128x1xf32> to vector<128x128xf32>
    %52 = arith.mulf %48, %51 : vector<128x128xf32>
    %53 = arith.truncf %52 : vector<128x128xf32> to vector<128x128xbf16>
    %cst_24 = arith.constant dense<0.000000e+00> : vector<128x128xf32>
    %54 = tpu.matmul %53, %49, %cst_24 {dimension_numbers = #tpu.dot_dimension_numbers<[1], [0], [0], [1], [0, 0, 1, 1], [], []>} : vector<128x128xbf16>, vector<128x128xbf16>, vector<128x128xf32> -> vector<128x128xf32>
    %55 = arith.truncf %54 : vector<128x128xf32> to vector<128x128xbf16>
    %cst_25 = arith.constant dense<0.000000e+00> : vector<128x128xf32>
    %56 = tpu.matmul %19, %55, %cst_25 {dimension_numbers = #tpu.dot_dimension_numbers<[1], [0], [0], [1], [0, 0, 1, 1], [], []>} : vector<128x128xbf16>, vector<128x128xbf16>, vector<128x128xf32> -> vector<128x128xf32>
    %57 = vector.broadcast %18 : vector<128x1xf32> to vector<128x128xf32>
    %58 = arith.mulf %56, %57 : vector<128x128xf32>
    %59 = vector.broadcast %50 : vector<1x128xf32> to vector<128x128xf32>
    %60 = arith.addf %58, %59 : vector<128x128xf32>
    %c0_26 = arith.constant 0 : index
    %c0_27 = arith.constant 0 : index
    %61 = vector.load %arg8[%c0_26, %c0_27] : memref<128x128xf32, #tpu.memory_space<vmem>>, vector<128x128xf32>
    tpu.vector_store %arg8[%c0_26, %c0_27], %60 {strides = array<i32>} : memref<128x128xf32, #tpu.memory_space<vmem>>, vector<128x128xf32>,
    return
  }
}

</mosaic_0001>

<llo_original>
// kernel: tpu_custom_call.1
$region0: #{tpu_custom_call.1}
  #allocation0 [shape = 'u32[]', space=smem, size = 0x4, offset = 0x4, fixed_abs, tag = 'smem constant byte address 0x4 - core index']
  #allocation1 [shape = 'u32[144,128]{1,0:T(1,128)}', space=vmem, size = 0x12000, scoped, tag = 'internal scratch']
  %s0 = inlined_call_operand.hbm [shape: f32[128,128], index: 0, kind: input, shape index: {}]
  %s1 = inlined_call_operand.hbm [shape: f32[128,128], index: 1, kind: input, shape index: {}]
  %s2 = inlined_call_operand.hbm [shape: bf16[128,128], index: 2, kind: input, shape index: {}]
  %s3 = inlined_call_operand.vmem [shape: f32[1,128], index: 3, kind: input, shape index: {}]
  %s4 = inlined_call_operand.hbm [shape: bf16[128,128], index: 4, kind: input, shape index: {}]
  %s5 = inlined_call_operand.vmem [shape: f32[1,128], index: 5, kind: input, shape index: {}]
  %s6 = inlined_call_operand.hbm [shape: bf16[128,128], index: 6, kind: input, shape index: {}]
  %s7 = inlined_call_operand.vmem [shape: f32[1,128], index: 7, kind: input, shape index: {}]
  %s8 = inlined_call_operand.hbm [shape: f32[128,128], index: 8, kind: output, shape index: {}]
  %s9 = sld [smem:[#allocation0]]
  $region62: #{tpu_custom_call.1} parent=0
    _
  %s11 = ssub.s32 1, %s9
  %s12 = scalar_select 0, %s11, %s9
  $region1: #{tpu_custom_call.1} parent=0
    #allocation2 [shape = 'u8[65536]{0}', space=vmem, size = 0x10000, scoped, tag = 'input window, operand 0, single buffered']
    #allocation3 [shape = 's32[1]{0}', space=sflag, size = 0x4, scoped, tag = 'scoped memory for tpu_custom_call.1']
    #allocation4 [shape = 's32[1]{0}', space=sflag, size = 0x4, scoped, tag = 'scoped memory for tpu_custom_call.1']
    #allocation5 [shape = 'u8[65536]{0}', space=vmem, size = 0x10000, scoped, tag = 'input window, operand 1, single buffered']
    #allocation6 [shape = 's32[1]{0}', space=sflag, size = 0x4, scoped, tag = 'scoped memory for tpu_custom_call.1']
    #allocation7 [shape = 'u8[32768]{0}', space=vmem, size = 0x8000, scoped, tag = 'input window, operand 2, single buffered']
    #allocation8 [shape = 'u8[32768]{0}', space=vmem, size = 0x8000, scoped, tag = 'input window, operand 4, single buffered']
    #allocation9 [shape = 's32[1]{0}', space=sflag, size = 0x4, scoped, tag = 'scoped memory for tpu_custom_call.1']
    #allocation10 [shape = 'u8[32768]{0}', space=vmem, size = 0x8000, scoped, tag = 'input window, operand 6, single buffered']
    #allocation11 [shape = 'u8[65536]{0}', space=vmem, size = 0x10000, scoped, tag = 'output window, operand 0, single buffered']
    %13 = vsyncpa [#allocation3], 0
    %14 = vsyncpa [#allocation6], 0
    %15 = vsyncpa [#allocation9], 0
    %16 = vsyncpa [#allocation4], 0
    // Predicated region
    $region2: #{tpu_custom_call.1} parent=1 // pred_check
      _
    $region3: #{tpu_custom_call.1} parent=1 // pred_check_branch
      %18 = sbr.rel (0) target = $region5
    $region4: #{tpu_custom_call.1} parent=1 // pred_region
      %s20 = ssub.s32 2048, 2048
      %21 = vsyncadd [#allocation3], %s20
      %s22 = sshll.u32 [#allocation2], 4
      %s23 = int_to_ptr.vmem [resolvable:$true] %s22
      %28 = dma.hbm_to_vmem [thread:$0]  %s0, 2048, %s23, [#allocation3], 128, 128, 8
    $region5: #{tpu_custom_call.1} parent=1 // pred_fallthru
      _
    // Predicated region
    $region6: #{tpu_custom_call.1} parent=1 // pred_check
      _
    $region7: #{tpu_custom_call.1} parent=1 // pred_check_branch
      %30 = sbr.rel (0) target = $region9
    $region8: #{tpu_custom_call.1} parent=1 // pred_region
      %s32 = ssub.s32 2048, 2048
      %33 = vsyncadd [#allocation6], %s32
      %s34 = sshll.u32 [#allocation5], 4
      %s35 = int_to_ptr.vmem [resolvable:$true] %s34
      %40 = dma.hbm_to_vmem [thread:$0]  %s1, 2048, %s35, [#allocation6], 128, 128, 8
    $region9: #{tpu_custom_call.1} parent=1 // pred_fallthru
      _
    // Predicated region
    $region10: #{tpu_custom_call.1} parent=1 // pred_check
      _
    $region11: #{tpu_custom_call.1} parent=1 // pred_check_branch
      %42 = sbr.rel (0) target = $region13
    $region12: #{tpu_custom_call.1} parent=1 // pred_region
      %s44 = ssub.s32 1024, 1024
      %45 = vsyncadd [#allocation6], %s44
      %s46 = sshll.u32 [#allocation7], 4
      %s47 = int_to_ptr.vmem [resolvable:$true] %s46
      %52 = dma.hbm_to_vmem [thread:$0]  %s2, 1024, %s47, [#allocation6], 64, 64, 4
    $region13: #{tpu_custom_call.1} parent=1 // pred_fallthru
      _
    // Predicated region
    $region14: #{tpu_custom_call.1} parent=1 // pred_check
      _
    $region15: #{tpu_custom_call.1} parent=1 // pred_check_branch
      %54 = sbr.rel (0) target = $region17
    $region16: #{tpu_custom_call.1} parent=1 // pred_region
      _
    $region17: #{tpu_custom_call.1} parent=1 // pred_fallthru
      _
    // Predicated region
    $region18: #{tpu_custom_call.1} parent=1 // pred_check
      _
    $region19: #{tpu_custom_call.1} parent=1 // pred_check_branch
      %56 = sbr.rel (0) target = $region21
    $region20: #{tpu_custom_call.1} parent=1 // pred_region
      %s58 = ssub.s32 1024, 1024
      %59 = vsyncadd [#allocation9], %s58
      %s60 = sshll.u32 [#allocation8], 4
      %s61 = int_to_ptr.vmem [resolvable:$true] %s60
      %66 = dma.hbm_to_vmem [thread:$0]  %s4, 1024, %s61, [#allocation9], 64, 64, 4
    $region21: #{tpu_custom_call.1} parent=1 // pred_fallthru
      _
    // Predicated region
    $region22: #{tpu_custom_call.1} parent=1 // pred_check
      _
    $region23: #{tpu_custom_call.1} parent=1 // pred_check_branch
      %68 = sbr.rel (0) target = $region25
    $region24: #{tpu_custom_call.1} parent=1 // pred_region
      _
    $region25: #{tpu_custom_call.1} parent=1 // pred_fallthru
      _
    // Predicated region
    $region26: #{tpu_custom_call.1} parent=1 // pred_check
      _
    $region27: #{tpu_custom_call.1} parent=1 // pred_check_branch
      %70 = sbr.rel (0) target = $region29
    $region28: #{tpu_custom_call.1} parent=1 // pred_region
      %s72 = ssub.s32 1024, 1024
      %73 = vsyncadd [#allocation9], %s72
      %s74 = sshll.u32 [#allocation10], 4
      %s75 = int_to_ptr.vmem [resolvable:$true] %s74
      %80 = dma.hbm_to_vmem [thread:$0]  %s6, 1024, %s75, [#allocation9], 64, 64, 4
    $region29: #{tpu_custom_call.1} parent=1 // pred_fallthru
      _
    // Predicated region
    $region30: #{tpu_custom_call.1} parent=1 // pred_check
      _
    $region31: #{tpu_custom_call.1} parent=1 // pred_check_branch
      %82 = sbr.rel (0) target = $region33
    $region32: #{tpu_custom_call.1} parent=1 // pred_region
      _
    $region33: #{tpu_custom_call.1} parent=1 // pred_fallthru
      _
    // Predicated region
    $region34: #{tpu_custom_call.1} parent=1 // pred_check
      _
    $region35: #{tpu_custom_call.1} parent=1 // pred_check_branch
      %84 = sbr.rel (0) target = $region37
    $region36: #{tpu_custom_call.1} parent=1 // pred_region
      %85 = dma.done [#allocation3], 2048
    $region37: #{tpu_custom_call.1} parent=1 // pred_fallthru
      _
    // Predicated region
    $region38: #{tpu_custom_call.1} parent=1 // pred_check
      _
    $region39: #{tpu_custom_call.1} parent=1 // pred_check_branch
      %87 = sbr.rel (0) target = $region41
    $region40: #{tpu_custom_call.1} parent=1 // pred_region
      %88 = dma.done [#allocation6], 2048
    $region41: #{tpu_custom_call.1} parent=1 // pred_fallthru
      _
    // Predicated region
    $region42: #{tpu_custom_call.1} parent=1 // pred_check
      _
    $region43: #{tpu_custom_call.1} parent=1 // pred_check_branch
      %90 = sbr.rel (0) target = $region45
    $region44: #{tpu_custom_call.1} parent=1 // pred_region
      %91 = dma.done [#allocation6], 1024
    $region45: #{tpu_custom_call.1} parent=1 // pred_fallthru
      _
    // Predicated region
    $region46: #{tpu_custom_call.1} parent=1 // pred_check
      _
    $region47: #{tpu_custom_call.1} parent=1 // pred_check_branch
      %93 = sbr.rel (0) target = $region49
    $region48: #{tpu_custom_call.1} parent=1 // pred_region
      %94 = dma.done [#allocation9], 1024
    $region49: #{tpu_custom_call.1} parent=1 // pred_fallthru
      _
    // Predicated region
    $region50: #{tpu_custom_call.1} parent=1 // pred_check
      _
    $region51: #{tpu_custom_call.1} parent=1 // pred_check_branch
      %96 = sbr.rel (0) target = $region53
    $region52: #{tpu_custom_call.1} parent=1 // pred_region
      %97 = dma.done [#allocation9], 1024
    $region53: #{tpu_custom_call.1} parent=1 // pred_fallthru
      _
    %v99 = vlaneseq
    %v100 = vshrl.u32 %v99, 7
    %v101 = vadd.s32 %v100, 8
    %v102 = vadd.s32 %v100, 16
    %v103 = vadd.s32 %v100, 24
    %v104 = vadd.s32 %v100, 32
    %v105 = vadd.s32 %v100, 40
    %v106 = vadd.s32 %v100, 48
    %v107 = vadd.s32 %v100, 56
    %v108 = vadd.s32 %v100, 64
    %v109 = vadd.s32 %v100, 72
    %v110 = vadd.s32 %v100, 80
    %v111 = vadd.s32 %v100, 88
    %v112 = vadd.s32 %v100, 96
    %v113 = vadd.s32 %v100, 104
    %v114 = vadd.s32 %v100, 112
    %v115 = vadd.s32 %v100, 120
    %v116 = vlaneseq
    %v117 = vand.u32 %v116, 127
    %v118 = vld [vmem:[#allocation2] sm:$0xff]
    %v119 = vld [vmem:[#allocation2 + $0x8] sm:$0xff]
    %v120 = vld [vmem:[#allocation2 + $0x10] sm:$0xff]
    %v121 = vld [vmem:[#allocation2 + $0x18] sm:$0xff]
    %v122 = vld [vmem:[#allocation2 + $0x20] sm:$0xff]
    %v123 = vld [vmem:[#allocation2 + $0x28] sm:$0xff]
    %v124 = vld [vmem:[#allocation2 + $0x30] sm:$0xff]
    %v125 = vld [vmem:[#allocation2 + $0x38] sm:$0xff]
    %v126 = vld [vmem:[#allocation2 + $0x40] sm:$0xff]
    %v127 = vld [vmem:[#allocation2 + $0x48] sm:$0xff]
    %v128 = vld [vmem:[#allocation2 + $0x50] sm:$0xff]
    %v129 = vld [vmem:[#allocation2 + $0x58] sm:$0xff]
    %v130 = vld [vmem:[#allocation2 + $0x60] sm:$0xff]
    %v131 = vld [vmem:[#allocation2 + $0x68] sm:$0xff]
    %v132 = vld [vmem:[#allocation2 + $0x70] sm:$0xff]
    %v133 = vld [vmem:[#allocation2 + $0x78] sm:$0xff]
    %vm134 = vcmp.ne.f32.partialorder %v118, 0.0
    %vm135 = vcmp.ne.f32.partialorder %v119, 0.0
    %vm136 = vcmp.ne.f32.partialorder %v120, 0.0
    %vm137 = vcmp.ne.f32.partialorder %v121, 0.0
    %vm138 = vcmp.ne.f32.partialorder %v122, 0.0
    %vm139 = vcmp.ne.f32.partialorder %v123, 0.0
    %vm140 = vcmp.ne.f32.partialorder %v124, 0.0
    %vm141 = vcmp.ne.f32.partialorder %v125, 0.0
    %vm142 = vcmp.ne.f32.partialorder %v126, 0.0
    %vm143 = vcmp.ne.f32.partialorder %v127, 0.0
    %vm144 = vcmp.ne.f32.partialorder %v128, 0.0
    %vm145 = vcmp.ne.f32.partialorder %v129, 0.0
    %vm146 = vcmp.ne.f32.partialorder %v130, 0.0
    %vm147 = vcmp.ne.f32.partialorder %v131, 0.0
    %vm148 = vcmp.ne.f32.partialorder %v132, 0.0
    %vm149 = vcmp.ne.f32.partialorder %v133, 0.0
    %vm150 = vcmp.eq.s32.totalorder %v100, %v117
    %vm151 = vcmp.eq.s32.totalorder %v101, %v117
    %vm152 = vcmp.eq.s32.totalorder %v102, %v117
    %vm153 = vcmp.eq.s32.totalorder %v103, %v117
    %vm154 = vcmp.eq.s32.totalorder %v104, %v117
    %vm155 = vcmp.eq.s32.totalorder %v105, %v117
    %vm156 = vcmp.eq.s32.totalorder %v106, %v117
    %vm157 = vcmp.eq.s32.totalorder %v107, %v117
    %vm158 = vcmp.eq.s32.totalorder %v108, %v117
    %vm159 = vcmp.eq.s32.totalorder %v109, %v117
    %vm160 = vcmp.eq.s32.totalorder %v110, %v117
    %vm161 = vcmp.eq.s32.totalorder %v111, %v117
    %vm162 = vcmp.eq.s32.totalorder %v112, %v117
    %vm163 = vcmp.eq.s32.totalorder %v113, %v117
    %vm164 = vcmp.eq.s32.totalorder %v114, %v117
    %vm165 = vcmp.eq.s32.totalorder %v115, %v117
    %vm166 = vcmp.lt.s32.totalorder %v100, 64
    %vm167 = vcmp.lt.s32.totalorder %v101, 64
    %vm168 = vcmp.lt.s32.totalorder %v102, 64
    %vm169 = vcmp.lt.s32.totalorder %v103, 64
    %vm170 = vcmp.lt.s32.totalorder %v104, 64
    %vm171 = vcmp.lt.s32.totalorder %v105, 64
    %vm172 = vcmp.lt.s32.totalorder %v106, 64
    %vm173 = vcmp.lt.s32.totalorder %v107, 64
    %vm174 = vcmp.lt.s32.totalorder %v108, 64
    %vm175 = vcmp.lt.s32.totalorder %v109, 64
    %vm176 = vcmp.lt.s32.totalorder %v110, 64
    %vm177 = vcmp.lt.s32.totalorder %v111, 64
    %vm178 = vcmp.lt.s32.totalorder %v112, 64
    %vm179 = vcmp.lt.s32.totalorder %v113, 64
    %vm180 = vcmp.lt.s32.totalorder %v114, 64
    %vm181 = vcmp.lt.s32.totalorder %v115, 64
    %vm182 = vmand %vm150, %vm166
    %vm183 = vmand %vm151, %vm167
    %vm184 = vmand %vm152, %vm168
    %vm185 = vmand %vm153, %vm169
    %vm186 = vmand %vm154, %vm170
    %vm187 = vmand %vm155, %vm171
    %vm188 = vmand %vm156, %vm172
    %vm189 = vmand %vm157, %vm173
    %vm190 = vmand %vm158, %vm174
    %vm191 = vmand %vm159, %vm175
    %vm192 = vmand %vm160, %vm176
    %vm193 = vmand %vm161, %vm177
    %vm194 = vmand %vm162, %vm178
    %vm195 = vmand %vm163, %vm179
    %vm196 = vmand %vm164, %vm180
    %vm197 = vmand %vm165, %vm181
    %vm198 = vmor %vm134, %vm182
    %vm199 = vmor %vm135, %vm183
    %vm200 = vmor %vm136, %vm184
    %vm201 = vmor %vm137, %vm185
    %vm202 = vmor %vm138, %vm186
    %vm203 = vmor %vm139, %vm187
    %vm204 = vmor %vm140, %vm188
    %vm205 = vmor %vm141, %vm189
    %vm206 = vmor %vm142, %vm190
    %vm207 = vmor %vm143, %vm191
    %vm208 = vmor %vm144, %vm192
    %vm209 = vmor %vm145, %vm193
    %vm210 = vmor %vm146, %vm194
    %vm211 = vmor %vm147, %vm195
    %vm212 = vmor %vm148, %vm196
    %vm213 = vmor %vm149, %vm197
    %v214 = vsel %vm198, 1, 0
    %v215 = vsel %vm199, 1, 0
    %v216 = vsel %vm200, 1, 0
    %v217 = vsel %vm201, 1, 0
    %v218 = vsel %vm202, 1, 0
    %v219 = vsel %vm203, 1, 0
    %v220 = vsel %vm204, 1, 0
    %v221 = vsel %vm205, 1, 0
    %v222 = vsel %vm206, 1, 0
    %v223 = vsel %vm207, 1, 0
    %v224 = vsel %vm208, 1, 0
    %v225 = vsel %vm209, 1, 0
    %v226 = vsel %vm210, 1, 0
    %v227 = vsel %vm211, 1, 0
    %v228 = vsel %vm212, 1, 0
    %v229 = vsel %vm213, 1, 0
    %v230 = vcvt.s32.f32 %v214
    %v231 = vcvt.s32.f32 %v215
    %v232 = vcvt.s32.f32 %v216
    %v233 = vcvt.s32.f32 %v217
    %v234 = vcvt.s32.f32 %v218
    %v235 = vcvt.s32.f32 %v219
    %v236 = vcvt.s32.f32 %v220
    %v237 = vcvt.s32.f32 %v221
    %v238 = vcvt.s32.f32 %v222
    %v239 = vcvt.s32.f32 %v223
    %v240 = vcvt.s32.f32 %v224
    %v241 = vcvt.s32.f32 %v225
    %v242 = vcvt.s32.f32 %v226
    %v243 = vcvt.s32.f32 %v227
    %v244 = vcvt.s32.f32 %v228
    %v245 = vcvt.s32.f32 %v229
    %246 = vadd.xlane.f32.xlu0 %v230
    %v247 = vpop.xlane.xlu0 %246
    %248 = vadd.xlane.f32.xlu0 %v231
    %v249 = vpop.xlane.xlu0 %248
    %250 = vadd.xlane.f32.xlu0 %v232
    %v251 = vpop.xlane.xlu0 %250
    %252 = vadd.xlane.f32.xlu0 %v233
    %v253 = vpop.xlane.xlu0 %252
    %254 = vadd.xlane.f32.xlu0 %v234
    %v255 = vpop.xlane.xlu0 %254
    %256 = vadd.xlane.f32.xlu0 %v235
    %v257 = vpop.xlane.xlu0 %256
    %258 = vadd.xlane.f32.xlu0 %v236
    %v259 = vpop.xlane.xlu0 %258
    %260 = vadd.xlane.f32.xlu0 %v237
    %v261 = vpop.xlane.xlu0 %260
    %262 = vadd.xlane.f32.xlu0 %v238
    %v263 = vpop.xlane.xlu0 %262
    %264 = vadd.xlane.f32.xlu0 %v239
    %v265 = vpop.xlane.xlu0 %264
    %266 = vadd.xlane.f32.xlu0 %v240
    %v267 = vpop.xlane.xlu0 %266
    %268 = vadd.xlane.f32.xlu0 %v241
    %v269 = vpop.xlane.xlu0 %268
    %270 = vadd.xlane.f32.xlu0 %v242
    %v271 = vpop.xlane.xlu0 %270
    %272 = vadd.xlane.f32.xlu0 %v243
    %v273 = vpop.xlane.xlu0 %272
    %274 = vadd.xlane.f32.xlu0 %v244
    %v275 = vpop.xlane.xlu0 %274
    %276 = vadd.xlane.f32.xlu0 %v245
    %v277 = vpop.xlane.xlu0 %276
    %vm278 = vcmp.gt.f32.partialorder %v247, 0.0
    %vm279 = vcmp.gt.f32.partialorder %v249, 0.0
    %vm280 = vcmp.gt.f32.partialorder %v251, 0.0
    %vm281 = vcmp.gt.f32.partialorder %v253, 0.0
    %vm282 = vcmp.gt.f32.partialorder %v255, 0.0
    %vm283 = vcmp.gt.f32.partialorder %v257, 0.0
    %vm284 = vcmp.gt.f32.partialorder %v259, 0.0
    %vm285 = vcmp.gt.f32.partialorder %v261, 0.0
    %vm286 = vcmp.gt.f32.partialorder %v263, 0.0
    %vm287 = vcmp.gt.f32.partialorder %v265, 0.0
    %vm288 = vcmp.gt.f32.partialorder %v267, 0.0
    %vm289 = vcmp.gt.f32.partialorder %v269, 0.0
    %vm290 = vcmp.gt.f32.partialorder %v271, 0.0
    %vm291 = vcmp.gt.f32.partialorder %v273, 0.0
    %vm292 = vcmp.gt.f32.partialorder %v275, 0.0
    %vm293 = vcmp.gt.f32.partialorder %v277, 0.0
    %v294 = vrsqrt.pop %v247
    %v295 = vrsqrt.pop %v249
    %v296 = vrsqrt.pop %v251
    %v297 = vrsqrt.pop %v253
    %v298 = vrsqrt.pop %v255
    %v299 = vrsqrt.pop %v257
    %v300 = vrsqrt.pop %v259
    %v301 = vrsqrt.pop %v261
    %v302 = vrsqrt.pop %v263
    %v303 = vrsqrt.pop %v265
    %v304 = vrsqrt.pop %v267
    %v305 = vrsqrt.pop %v269
    %v306 = vrsqrt.pop %v271
    %v307 = vrsqrt.pop %v273
    %v308 = vrsqrt.pop %v275
    %v309 = vrsqrt.pop %v277
    %v310 = vsel %vm278, %v294, 0.0
    %v311 = vsel %vm279, %v295, 0.0
    %v312 = vsel %vm280, %v296, 0.0
    %v313 = vsel %vm281, %v297, 0.0
    %v314 = vsel %vm282, %v298, 0.0
    %v315 = vsel %vm283, %v299, 0.0
    %v316 = vsel %vm284, %v300, 0.0
    %v317 = vsel %vm285, %v301, 0.0
    %v318 = vsel %vm286, %v302, 0.0
    %v319 = vsel %vm287, %v303, 0.0
    %v320 = vsel %vm288, %v304, 0.0
    %v321 = vsel %vm289, %v305, 0.0
    %v322 = vsel %vm290, %v306, 0.0
    %v323 = vsel %vm291, %v307, 0.0
    %v324 = vsel %vm292, %v308, 0.0
    %v325 = vsel %vm293, %v309, 0.0
    %v326 = vpack.c.bf16 %v231, %v230
    %v327 = vpack.c.bf16 %v233, %v232
    %v328 = vpack.c.bf16 %v235, %v234
    %v329 = vpack.c.bf16 %v237, %v236
    %v330 = vpack.c.bf16 %v239, %v238
    %v331 = vpack.c.bf16 %v241, %v240
    %v332 = vpack.c.bf16 %v243, %v242
    %v333 = vpack.c.bf16 %v245, %v244
    %v334 = vld [vmem:[#allocation5] sm:$0xff]
    %v335 = vld [vmem:[#allocation5 + $0x8] sm:$0xff]
    %v336 = vld [vmem:[#allocation5 + $0x10] sm:$0xff]
    %v337 = vld [vmem:[#allocation5 + $0x18] sm:$0xff]
    %v338 = vld [vmem:[#allocation5 + $0x20] sm:$0xff]
    %v339 = vld [vmem:[#allocation5 + $0x28] sm:$0xff]
    %v340 = vld [vmem:[#allocation5 + $0x30] sm:$0xff]
    %v341 = vld [vmem:[#allocation5 + $0x38] sm:$0xff]
    %v342 = vld [vmem:[#allocation5 + $0x40] sm:$0xff]
    %v343 = vld [vmem:[#allocation5 + $0x48] sm:$0xff]
    %v344 = vld [vmem:[#allocation5 + $0x50] sm:$0xff]
    %v345 = vld [vmem:[#allocation5 + $0x58] sm:$0xff]
    %v346 = vld [vmem:[#allocation5 + $0x60] sm:$0xff]
    %v347 = vld [vmem:[#allocation5 + $0x68] sm:$0xff]
    %v348 = vld [vmem:[#allocation5 + $0x70] sm:$0xff]
    %v349 = vld [vmem:[#allocation5 + $0x78] sm:$0xff]
    %v350 = vld [vmem:[#allocation7] sm:$0xf]
    %v351 = vld [vmem:[#allocation7 + $0x4] sm:$0xf]
    %v352 = vld [vmem:[#allocation7 + $0x8] sm:$0xf]
    %v353 = vld [vmem:[#allocation7 + $0xc] sm:$0xf]
    %v354 = vld [vmem:[#allocation7 + $0x10] sm:$0xf]
    %v355 = vld [vmem:[#allocation7 + $0x14] sm:$0xf]
    %v356 = vld [vmem:[#allocation7 + $0x18] sm:$0xf]
    %v357 = vld [vmem:[#allocation7 + $0x1c] sm:$0xf]
    %v358 = vld [vmem:[#allocation7 + $0x20] sm:$0xf]
    %v359 = vld [vmem:[#allocation7 + $0x24] sm:$0xf]
    %v360 = vld [vmem:[#allocation7 + $0x28] sm:$0xf]
    %v361 = vld [vmem:[#allocation7 + $0x2c] sm:$0xf]
    %v362 = vld [vmem:[#allocation7 + $0x30] sm:$0xf]
    %v363 = vld [vmem:[#allocation7 + $0x34] sm:$0xf]
    %v364 = vld [vmem:[#allocation7 + $0x38] sm:$0xf]
    %v365 = vld [vmem:[#allocation7 + $0x3c] sm:$0xf]
    %v366 = vld [vmem:[%s3] sm:$0x1]
    %v367 = vmul.f32 %v334, %v310
    %v368 = vmul.f32 %v335, %v311
    %v369 = vmul.f32 %v336, %v312
    %v370 = vmul.f32 %v337, %v313
    %v371 = vmul.f32 %v338, %v314
    %v372 = vmul.f32 %v339, %v315
    %v373 = vmul.f32 %v340, %v316
    %v374 = vmul.f32 %v341, %v317
    %v375 = vmul.f32 %v342, %v318
    %v376 = vmul.f32 %v343, %v319
    %v377 = vmul.f32 %v344, %v320
    %v378 = vmul.f32 %v345, %v321
    %v379 = vmul.f32 %v346, %v322
    %v380 = vmul.f32 %v347, %v323
    %v381 = vmul.f32 %v348, %v324
    %v382 = vmul.f32 %v349, %v325
    %v383 = vpack.c.bf16 %v368, %v367
    %v384 = vpack.c.bf16 %v370, %v369
    %v385 = vpack.c.bf16 %v372, %v371
    %v386 = vpack.c.bf16 %v374, %v373
    %v387 = vpack.c.bf16 %v376, %v375
    %v388 = vpack.c.bf16 %v378, %v377
    %v389 = vpack.c.bf16 %v380, %v379
    %v390 = vpack.c.bf16 %v382, %v381
    %v407 = vunpack.c.l.b16 %v350
    %v408 = vunpack.c.l.b16 %v351
    %v409 = vunpack.c.l.b16 %v352
    %v410 = vunpack.c.l.b16 %v353
    %v411 = vunpack.c.l.b16 %v354
    %v412 = vunpack.c.l.b16 %v355
    %v413 = vunpack.c.l.b16 %v356
    %v414 = vunpack.c.l.b16 %v357
    %v415 = vunpack.c.l.b16 %v358
    %v416 = vunpack.c.l.b16 %v359
    %v417 = vunpack.c.l.b16 %v360
    %v418 = vunpack.c.l.b16 %v361
    %v419 = vunpack.c.l.b16 %v362
    %v420 = vunpack.c.l.b16 %v363
    %v421 = vunpack.c.l.b16 %v364
    %v422 = vunpack.c.l.b16 %v365
    %v423 = vpack.c.b16 %v408, %v407
    %v424 = vpack.c.b16 %v410, %v409
    %v425 = vpack.c.b16 %v412, %v411
    %v426 = vpack.c.b16 %v414, %v413
    %v427 = vpack.c.b16 %v416, %v415
    %v428 = vpack.c.b16 %v418, %v417
    %v429 = vpack.c.b16 %v420, %v419
    %v430 = vpack.c.b16 %v422, %v421
    %439 = vmatprep.subr.bf16.mxu0 0
    %440 = vmatpush1.bf16.msra.mxu0 %v423
    %441 = vmatprep.subr.bf16.mxu0 0
    %442 = vmatpush1.bf16.msra.mxu0 %v424
    %443 = vmatprep.subr.bf16.mxu0 0
    %444 = vmatpush1.bf16.msra.mxu0 %v425
    %445 = vmatprep.subr.bf16.mxu0 0
    %446 = vmatpush1.bf16.msra.mxu0 %v426
    %447 = vmatprep.subr.bf16.mxu0 0
    %448 = vmatpush1.bf16.msra.mxu0 %v427
    %449 = vmatprep.subr.bf16.mxu0 0
    %450 = vmatpush1.bf16.msra.mxu0 %v428
    %451 = vmatprep.subr.bf16.mxu0 0
    %452 = vmatpush1.bf16.msra.mxu0 %v429
    %453 = vmatprep.subr.bf16.mxu0 0
    %454 = vmatpush1.bf16.msra.mxu0 %v430
    %455 = vmatprep.subr.bf16.mxu0 0
    %456 = vmatpush1.bf16.msra.mxu0 0
    %457 = vmatprep.subr.bf16.mxu0 0
    %458 = vmatpush1.bf16.msra.mxu0 0
    %459 = vmatprep.subr.bf16.mxu0 0
    %460 = vmatpush1.bf16.msra.mxu0 0
    %461 = vmatprep.subr.bf16.mxu0 0
    %462 = vmatpush1.bf16.msra.mxu0 0
    %463 = vmatprep.subr.bf16.mxu0 0
    %464 = vmatpush1.bf16.msra.mxu0 0
    %465 = vmatprep.subr.bf16.mxu0 0
    %466 = vmatpush1.bf16.msra.mxu0 0
    %467 = vmatprep.subr.bf16.mxu0 0
    %468 = vmatpush1.bf16.msra.mxu0 0
    %469 = vmatprep.subr.bf16.mxu0 0
    %470 = vmatpush1.bf16.msra.mxu0 0
    %471 = vmatprep.mubr.bf16.mxu0 0
    %472 = vmatmul.mubr.bf16.gmra.mrb[0].mxu0 %v383
    %v473 = vpop.f32.mrb[0].mxu0
    %v474 = vadd.f32 0.0, %v473
    %v475 = vpop.f32.mrb[0].mxu0
    %v476 = vpop.f32.mrb[0].mxu0
    %v477 = vadd.f32 0.0, %v476
    %v478 = vpop.f32.mrb[0].mxu0
    %479 = vmatprep.mubr.bf16.mxu0 0
    %480 = vmatmul.mubr.bf16.gmra.mrb[0].mxu0 %v384
    %v481 = vpop.f32.mrb[0].mxu0
    %v482 = vadd.f32 0.0, %v481
    %v483 = vpop.f32.mrb[0].mxu0
    %v484 = vpop.f32.mrb[0].mxu0
    %v485 = vadd.f32 0.0, %v484
    %v486 = vpop.f32.mrb[0].mxu0
    %487 = vmatprep.mubr.bf16.mxu0 0
    %488 = vmatmul.mubr.bf16.gmra.mrb[0].mxu0 %v385
    %v489 = vpop.f32.mrb[0].mxu0
    %v490 = vadd.f32 0.0, %v489
    %v491 = vpop.f32.mrb[0].mxu0
    %v492 = vpop.f32.mrb[0].mxu0
    %v493 = vadd.f32 0.0, %v492
    %v494 = vpop.f32.mrb[0].mxu0
    %495 = vmatprep.mubr.bf16.mxu0 0
    %496 = vmatmul.mubr.bf16.gmra.mrb[0].mxu0 %v386
    %v497 = vpop.f32.mrb[0].mxu0
    %v498 = vadd.f32 0.0, %v497
    %v499 = vpop.f32.mrb[0].mxu0
    %v500 = vpop.f32.mrb[0].mxu0
    %v501 = vadd.f32 0.0, %v500
    %v502 = vpop.f32.mrb[0].mxu0
    %503 = vmatprep.mubr.bf16.mxu0 0
    %504 = vmatmul.mubr.bf16.gmra.mrb[0].mxu0 %v387
    %v505 = vpop.f32.mrb[0].mxu0
    %v506 = vadd.f32 0.0, %v505
    %v507 = vpop.f32.mrb[0].mxu0
    %v508 = vpop.f32.mrb[0].mxu0
    %v509 = vadd.f32 0.0, %v508
    %v510 = vpop.f32.mrb[0].mxu0
    %511 = vmatprep.mubr.bf16.mxu0 0
    %512 = vmatmul.mubr.bf16.gmra.mrb[0].mxu0 %v388
    %v513 = vpop.f32.mrb[0].mxu0
    %v514 = vadd.f32 0.0, %v513
    %v515 = vpop.f32.mrb[0].mxu0
    %v516 = vpop.f32.mrb[0].mxu0
    %v517 = vadd.f32 0.0, %v516
    %v518 = vpop.f32.mrb[0].mxu0
    %519 = vmatprep.mubr.bf16.mxu0 0
    %520 = vmatmul.mubr.bf16.gmra.mrb[0].mxu0 %v389
    %v521 = vpop.f32.mrb[0].mxu0
    %v522 = vadd.f32 0.0, %v521
    %v523 = vpop.f32.mrb[0].mxu0
    %v524 = vpop.f32.mrb[0].mxu0
    %v525 = vadd.f32 0.0, %v524
    %v526 = vpop.f32.mrb[0].mxu0
    %527 = vmatprep.mubr.bf16.mxu0 0
    %528 = vmatmul.mubr.bf16.gmra.mrb[0].mxu0 %v390
    %v529 = vpop.f32.mrb[0].mxu0
    %v530 = vadd.f32 0.0, %v529
    %v531 = vpop.f32.mrb[0].mxu0
    %v532 = vpop.f32.mrb[0].mxu0
    %v533 = vadd.f32 0.0, %v532
    %v534 = vpop.f32.mrb[0].mxu0
    %535 = vdwg.mxu0
    %v536 = vpack.c.bf16 %v477, %v474
    %v537 = vpack.c.bf16 %v485, %v482
    %v538 = vpack.c.bf16 %v493, %v490
    %v539 = vpack.c.bf16 %v501, %v498
    %v540 = vpack.c.bf16 %v509, %v506
    %v541 = vpack.c.bf16 %v517, %v514
    %v542 = vpack.c.bf16 %v525, %v522
    %v543 = vpack.c.bf16 %v533, %v530
    %544 = vmatprep.subr.bf16.mxu0 0
    %545 = vmatpush1.bf16.msra.mxu0 %v536
    %546 = vmatprep.subr.bf16.mxu0 0
    %547 = vmatpush1.bf16.msra.mxu0 %v537
    %548 = vmatprep.subr.bf16.mxu0 0
    %549 = vmatpush1.bf16.msra.mxu0 %v538
    %550 = vmatprep.subr.bf16.mxu0 0
    %551 = vmatpush1.bf16.msra.mxu0 %v539
    %552 = vmatprep.subr.bf16.mxu0 0
    %553 = vmatpush1.bf16.msra.mxu0 %v540
    %554 = vmatprep.subr.bf16.mxu0 0
    %555 = vmatpush1.bf16.msra.mxu0 %v541
    %556 = vmatprep.subr.bf16.mxu0 0
    %557 = vmatpush1.bf16.msra.mxu0 %v542
    %558 = vmatprep.subr.bf16.mxu0 0
    %559 = vmatpush1.bf16.msra.mxu0 %v543
    %560 = vmatprep.subr.bf16.mxu0 0
    %561 = vmatpush1.bf16.msra.mxu0 0
    %562 = vmatprep.subr.bf16.mxu0 0
    %563 = vmatpush1.bf16.msra.mxu0 0
    %564 = vmatprep.subr.bf16.mxu0 0
    %565 = vmatpush1.bf16.msra.mxu0 0
    %566 = vmatprep.subr.bf16.mxu0 0
    %567 = vmatpush1.bf16.msra.mxu0 0
    %568 = vmatprep.subr.bf16.mxu0 0
    %569 = vmatpush1.bf16.msra.mxu0 0
    %570 = vmatprep.subr.bf16.mxu0 0
    %571 = vmatpush1.bf16.msra.mxu0 0
    %572 = vmatprep.subr.bf16.mxu0 0
    %573 = vmatpush1.bf16.msra.mxu0 0
    %574 = vmatprep.subr.bf16.mxu0 0
    %575 = vmatpush1.bf16.msra.mxu0 0
    %576 = vmatprep.mubr.bf16.mxu0 0
    %577 = vmatmul.mubr.bf16.gmra.mrb[0].mxu0 %v326
    %v578 = vpop.f32.mrb[0].mxu0
    %v579 = vadd.f32 0.0, %v578
    %v580 = vpop.f32.mrb[0].mxu0
    %v581 = vpop.f32.mrb[0].mxu0
    %v582 = vadd.f32 0.0, %v581
    %v583 = vpop.f32.mrb[0].mxu0
    %584 = vmatprep.mubr.bf16.mxu0 0
    %585 = vmatmul.mubr.bf16.gmra.mrb[0].mxu0 %v327
    %v586 = vpop.f32.mrb[0].mxu0
    %v587 = vadd.f32 0.0, %v586
    %v588 = vpop.f32.mrb[0].mxu0
    %v589 = vpop.f32.mrb[0].mxu0
    %v590 = vadd.f32 0.0, %v589
    %v591 = vpop.f32.mrb[0].mxu0
    %592 = vmatprep.mubr.bf16.mxu0 0
    %593 = vmatmul.mubr.bf16.gmra.mrb[0].mxu0 %v328
    %v594 = vpop.f32.mrb[0].mxu0
    %v595 = vadd.f32 0.0, %v594
    %v596 = vpop.f32.mrb[0].mxu0
    %v597 = vpop.f32.mrb[0].mxu0
    %v598 = vadd.f32 0.0, %v597
    %v599 = vpop.f32.mrb[0].mxu0
    %600 = vmatprep.mubr.bf16.mxu0 0
    %601 = vmatmul.mubr.bf16.gmra.mrb[0].mxu0 %v329
    %v602 = vpop.f32.mrb[0].mxu0
    %v603 = vadd.f32 0.0, %v602
    %v604 = vpop.f32.mrb[0].mxu0
    %v605 = vpop.f32.mrb[0].mxu0
    %v606 = vadd.f32 0.0, %v605
    %v607 = vpop.f32.mrb[0].mxu0
    %608 = vmatprep.mubr.bf16.mxu0 0
    %609 = vmatmul.mubr.bf16.gmra.mrb[0].mxu0 %v330
    %v610 = vpop.f32.mrb[0].mxu0
    %v611 = vadd.f32 0.0, %v610
    %v612 = vpop.f32.mrb[0].mxu0
    %v613 = vpop.f32.mrb[0].mxu0
    %v614 = vadd.f32 0.0, %v613
    %v615 = vpop.f32.mrb[0].mxu0
    %616 = vmatprep.mubr.bf16.mxu0 0
    %617 = vmatmul.mubr.bf16.gmra.mrb[0].mxu0 %v331
    %v618 = vpop.f32.mrb[0].mxu0
    %v619 = vadd.f32 0.0, %v618
    %v620 = vpop.f32.mrb[0].mxu0
    %v621 = vpop.f32.mrb[0].mxu0
    %v622 = vadd.f32 0.0, %v621
    %v623 = vpop.f32.mrb[0].mxu0
    %624 = vmatprep.mubr.bf16.mxu0 0
    %625 = vmatmul.mubr.bf16.gmra.mrb[0].mxu0 %v332
    %v626 = vpop.f32.mrb[0].mxu0
    %v627 = vadd.f32 0.0, %v626
    %v628 = vpop.f32.mrb[0].mxu0
    %v629 = vpop.f32.mrb[0].mxu0
    %v630 = vadd.f32 0.0, %v629
    %v631 = vpop.f32.mrb[0].mxu0
    %632 = vmatprep.mubr.bf16.mxu0 0
    %633 = vmatmul.mubr.bf16.gmra.mrb[0].mxu0 %v333
    %v634 = vpop.f32.mrb[0].mxu0
    %v635 = vadd.f32 0.0, %v634
    %v636 = vpop.f32.mrb[0].mxu0
    %v637 = vpop.f32.mrb[0].mxu0
    %v638 = vadd.f32 0.0, %v637
    %v639 = vpop.f32.mrb[0].mxu0
    %640 = vdwg.mxu0
    %v641 = vmul.f32 %v579, %v310
    %v642 = vmul.f32 %v582, %v311
    %v643 = vmul.f32 %v587, %v312
    %v644 = vmul.f32 %v590, %v313
    %v645 = vmul.f32 %v595, %v314
    %v646 = vmul.f32 %v598, %v315
    %v647 = vmul.f32 %v603, %v316
    %v648 = vmul.f32 %v606, %v317
    %v649 = vmul.f32 %v611, %v318
    %v650 = vmul.f32 %v614, %v319
    %v651 = vmul.f32 %v619, %v320
    %v652 = vmul.f32 %v622, %v321
    %v653 = vmul.f32 %v627, %v322
    %v654 = vmul.f32 %v630, %v323
    %v655 = vmul.f32 %v635, %v324
    %v656 = vmul.f32 %v638, %v325
    %v658 = vlaneseq
    %v659 = vshrl.u32 %v658, 7
    %v660 = vsub.s32 0, %v659
    %v661 = vrot.slane %v366, %v660
    %v663 = vadd.f32 %v641, %v661
    %v664 = vadd.f32 %v642, %v661
    %v665 = vadd.f32 %v643, %v661
    %v666 = vadd.f32 %v644, %v661
    %v667 = vadd.f32 %v645, %v661
    %v668 = vadd.f32 %v646, %v661
    %v669 = vadd.f32 %v647, %v661
    %v670 = vadd.f32 %v648, %v661
    %v671 = vadd.f32 %v649, %v661
    %v672 = vadd.f32 %v650, %v661
    %v673 = vadd.f32 %v651, %v661
    %v674 = vadd.f32 %v652, %v661
    %v675 = vadd.f32 %v653, %v661
    %v676 = vadd.f32 %v654, %v661
    %v677 = vadd.f32 %v655, %v661
    %v678 = vadd.f32 %v656, %v661
    %v679 = vmax.f32 %v663, 0.0
    %v680 = vmax.f32 %v664, 0.0
    %v681 = vmax.f32 %v665, 0.0
    %v682 = vmax.f32 %v666, 0.0
    %v683 = vmax.f32 %v667, 0.0
    %v684 = vmax.f32 %v668, 0.0
    %v685 = vmax.f32 %v669, 0.0
    %v686 = vmax.f32 %v670, 0.0
    %v687 = vmax.f32 %v671, 0.0
    %v688 = vmax.f32 %v672, 0.0
    %v689 = vmax.f32 %v673, 0.0
    %v690 = vmax.f32 %v674, 0.0
    %v691 = vmax.f32 %v675, 0.0
    %v692 = vmax.f32 %v676, 0.0
    %v693 = vmax.f32 %v677, 0.0
    %v694 = vmax.f32 %v678, 0.0
    %v695 = vld [vmem:[#allocation8] sm:$0xf]
    %v696 = vld [vmem:[#allocation8 + $0x4] sm:$0xf]
    %v697 = vld [vmem:[#allocation8 + $0x8] sm:$0xf]
    %v698 = vld [vmem:[#allocation8 + $0xc] sm:$0xf]
    %v699 = vld [vmem:[#allocation8 + $0x10] sm:$0xf]
    %v700 = vld [vmem:[#allocation8 + $0x14] sm:$0xf]
    %v701 = vld [vmem:[#allocation8 + $0x18] sm:$0xf]
    %v702 = vld [vmem:[#allocation8 + $0x1c] sm:$0xf]
    %v703 = vld [vmem:[#allocation8 + $0x20] sm:$0xf]
    %v704 = vld [vmem:[#allocation8 + $0x24] sm:$0xf]
    %v705 = vld [vmem:[#allocation8 + $0x28] sm:$0xf]
    %v706 = vld [vmem:[#allocation8 + $0x2c] sm:$0xf]
    %v707 = vld [vmem:[#allocation8 + $0x30] sm:$0xf]
    %v708 = vld [vmem:[#allocation8 + $0x34] sm:$0xf]
    %v709 = vld [vmem:[#allocation8 + $0x38] sm:$0xf]
    %v710 = vld [vmem:[#allocation8 + $0x3c] sm:$0xf]
    %v711 = vld [vmem:[%s5] sm:$0x1]
    %v712 = vmul.f32 %v679, %v310
    %v713 = vmul.f32 %v680, %v311
    %v714 = vmul.f32 %v681, %v312
    %v715 = vmul.f32 %v682, %v313
    %v716 = vmul.f32 %v683, %v314
    %v717 = vmul.f32 %v684, %v315
    %v718 = vmul.f32 %v685, %v316
    %v719 = vmul.f32 %v686, %v317
    %v720 = vmul.f32 %v687, %v318
    %v721 = vmul.f32 %v688, %v319
    %v722 = vmul.f32 %v689, %v320
    %v723 = vmul.f32 %v690, %v321
    %v724 = vmul.f32 %v691, %v322
    %v725 = vmul.f32 %v692, %v323
    %v726 = vmul.f32 %v693, %v324
    %v727 = vmul.f32 %v694, %v325
    %v728 = vpack.c.bf16 %v713, %v712
    %v729 = vpack.c.bf16 %v715, %v714
    %v730 = vpack.c.bf16 %v717, %v716
    %v731 = vpack.c.bf16 %v719, %v718
    %v732 = vpack.c.bf16 %v721, %v720
    %v733 = vpack.c.bf16 %v723, %v722
    %v734 = vpack.c.bf16 %v725, %v724
    %v735 = vpack.c.bf16 %v727, %v726
    %v752 = vunpack.c.l.b16 %v695
    %v753 = vunpack.c.l.b16 %v696
    %v754 = vunpack.c.l.b16 %v697
    %v755 = vunpack.c.l.b16 %v698
    %v756 = vunpack.c.l.b16 %v699
    %v757 = vunpack.c.l.b16 %v700
    %v758 = vunpack.c.l.b16 %v701
    %v759 = vunpack.c.l.b16 %v702
    %v760 = vunpack.c.l.b16 %v703
    %v761 = vunpack.c.l.b16 %v704
    %v762 = vunpack.c.l.b16 %v705
    %v763 = vunpack.c.l.b16 %v706
    %v764 = vunpack.c.l.b16 %v707
    %v765 = vunpack.c.l.b16 %v708
    %v766 = vunpack.c.l.b16 %v709
    %v767 = vunpack.c.l.b16 %v710
    %v768 = vpack.c.b16 %v753, %v752
    %v769 = vpack.c.b16 %v755, %v754
    %v770 = vpack.c.b16 %v757, %v756
    %v771 = vpack.c.b16 %v759, %v758
    %v772 = vpack.c.b16 %v761, %v760
    %v773 = vpack.c.b16 %v763, %v762
    %v774 = vpack.c.b16 %v765, %v764
    %v775 = vpack.c.b16 %v767, %v766
    %784 = vmatprep.subr.bf16.mxu0 0
    %785 = vmatpush1.bf16.msra.mxu0 %v768
    %786 = vmatprep.subr.bf16.mxu0 0
    %787 = vmatpush1.bf16.msra.mxu0 %v769
    %788 = vmatprep.subr.bf16.mxu0 0
    %789 = vmatpush1.bf16.msra.mxu0 %v770
    %790 = vmatprep.subr.bf16.mxu0 0
    %791 = vmatpush1.bf16.msra.mxu0 %v771
    %792 = vmatprep.subr.bf16.mxu0 0
    %793 = vmatpush1.bf16.msra.mxu0 %v772
    %794 = vmatprep.subr.bf16.mxu0 0
    %795 = vmatpush1.bf16.msra.mxu0 %v773
    %796 = vmatprep.subr.bf16.mxu0 0
    %797 = vmatpush1.bf16.msra.mxu0 %v774
    %798 = vmatprep.subr.bf16.mxu0 0
    %799 = vmatpush1.bf16.msra.mxu0 %v775
    %800 = vmatprep.subr.bf16.mxu0 0
    %801 = vmatpush1.bf16.msra.mxu0 0
    %802 = vmatprep.subr.bf16.mxu0 0
    %803 = vmatpush1.bf16.msra.mxu0 0
    %804 = vmatprep.subr.bf16.mxu0 0
    %805 = vmatpush1.bf16.msra.mxu0 0
    %806 = vmatprep.subr.bf16.mxu0 0
    %807 = vmatpush1.bf16.msra.mxu0 0
    %808 = vmatprep.subr.bf16.mxu0 0
    %809 = vmatpush1.bf16.msra.mxu0 0
    %810 = vmatprep.subr.bf16.mxu0 0
    %811 = vmatpush1.bf16.msra.mxu0 0
    %812 = vmatprep.subr.bf16.mxu0 0
    %813 = vmatpush1.bf16.msra.mxu0 0
    %814 = vmatprep.subr.bf16.mxu0 0
    %815 = vmatpush1.bf16.msra.mxu0 0
    %816 = vmatprep.mubr.bf16.mxu0 0
    %817 = vmatmul.mubr.bf16.gmra.mrb[0].mxu0 %v728
    %v818 = vpop.f32.mrb[0].mxu0
    %v819 = vadd.f32 0.0, %v818
    %v820 = vpop.f32.mrb[0].mxu0
    %v821 = vpop.f32.mrb[0].mxu0
    %v822 = vadd.f32 0.0, %v821
    %v823 = vpop.f32.mrb[0].mxu0
    %824 = vmatprep.mubr.bf16.mxu0 0
    %825 = vmatmul.mubr.bf16.gmra.mrb[0].mxu0 %v729
    %v826 = vpop.f32.mrb[0].mxu0
    %v827 = vadd.f32 0.0, %v826
    %v828 = vpop.f32.mrb[0].mxu0
    %v829 = vpop.f32.mrb[0].mxu0
    %v830 = vadd.f32 0.0, %v829
    %v831 = vpop.f32.mrb[0].mxu0
    %832 = vmatprep.mubr.bf16.mxu0 0
    %833 = vmatmul.mubr.bf16.gmra.mrb[0].mxu0 %v730
    %v834 = vpop.f32.mrb[0].mxu0
    %v835 = vadd.f32 0.0, %v834
    %v836 = vpop.f32.mrb[0].mxu0
    %v837 = vpop.f32.mrb[0].mxu0
    %v838 = vadd.f32 0.0, %v837
    %v839 = vpop.f32.mrb[0].mxu0
    %840 = vmatprep.mubr.bf16.mxu0 0
    %841 = vmatmul.mubr.bf16.gmra.mrb[0].mxu0 %v731
    %v842 = vpop.f32.mrb[0].mxu0
    %v843 = vadd.f32 0.0, %v842
    %v844 = vpop.f32.mrb[0].mxu0
    %v845 = vpop.f32.mrb[0].mxu0
    %v846 = vadd.f32 0.0, %v845
    %v847 = vpop.f32.mrb[0].mxu0
    %848 = vmatprep.mubr.bf16.mxu0 0
    %849 = vmatmul.mubr.bf16.gmra.mrb[0].mxu0 %v732
    %v850 = vpop.f32.mrb[0].mxu0
    %v851 = vadd.f32 0.0, %v850
    %v852 = vpop.f32.mrb[0].mxu0
    %v853 = vpop.f32.mrb[0].mxu0
    %v854 = vadd.f32 0.0, %v853
    %v855 = vpop.f32.mrb[0].mxu0
    %856 = vmatprep.mubr.bf16.mxu0 0
    %857 = vmatmul.mubr.bf16.gmra.mrb[0].mxu0 %v733
    %v858 = vpop.f32.mrb[0].mxu0
    %v859 = vadd.f32 0.0, %v858
    %v860 = vpop.f32.mrb[0].mxu0
    %v861 = vpop.f32.mrb[0].mxu0
    %v862 = vadd.f32 0.0, %v861
    %v863 = vpop.f32.mrb[0].mxu0
    %864 = vmatprep.mubr.bf16.mxu0 0
    %865 = vmatmul.mubr.bf16.gmra.mrb[0].mxu0 %v734
    %v866 = vpop.f32.mrb[0].mxu0
    %v867 = vadd.f32 0.0, %v866
    %v868 = vpop.f32.mrb[0].mxu0
    %v869 = vpop.f32.mrb[0].mxu0
    %v870 = vadd.f32 0.0, %v869
    %v871 = vpop.f32.mrb[0].mxu0
    %872 = vmatprep.mubr.bf16.mxu0 0
    %873 = vmatmul.mubr.bf16.gmra.mrb[0].mxu0 %v735
    %v874 = vpop.f32.mrb[0].mxu0
    %v875 = vadd.f32 0.0, %v874
    %v876 = vpop.f32.mrb[0].mxu0
    %v877 = vpop.f32.mrb[0].mxu0
    %v878 = vadd.f32 0.0, %v877
    %v879 = vpop.f32.mrb[0].mxu0
    %880 = vdwg.mxu0
    %v881 = vpack.c.bf16 %v822, %v819
    %v882 = vpack.c.bf16 %v830, %v827
    %v883 = vpack.c.bf16 %v838, %v835
    %v884 = vpack.c.bf16 %v846, %v843
    %v885 = vpack.c.bf16 %v854, %v851
    %v886 = vpack.c.bf16 %v862, %v859
    %v887 = vpack.c.bf16 %v870, %v867
    %v888 = vpack.c.bf16 %v878, %v875
    %889 = vmatprep.subr.bf16.mxu0 0
    %890 = vmatpush1.bf16.msra.mxu0 %v881
    %891 = vmatprep.subr.bf16.mxu0 0
    %892 = vmatpush1.bf16.msra.mxu0 %v882
    %893 = vmatprep.subr.bf16.mxu0 0
    %894 = vmatpush1.bf16.msra.mxu0 %v883
    %895 = vmatprep.subr.bf16.mxu0 0
    %896 = vmatpush1.bf16.msra.mxu0 %v884
    %897 = vmatprep.subr.bf16.mxu0 0
    %898 = vmatpush1.bf16.msra.mxu0 %v885
    %899 = vmatprep.subr.bf16.mxu0 0
    %900 = vmatpush1.bf16.msra.mxu0 %v886
    %901 = vmatprep.subr.bf16.mxu0 0
    %902 = vmatpush1.bf16.msra.mxu0 %v887
    %903 = vmatprep.subr.bf16.mxu0 0
    %904 = vmatpush1.bf16.msra.mxu0 %v888
    %905 = vmatprep.subr.bf16.mxu0 0
    %906 = vmatpush1.bf16.msra.mxu0 0
    %907 = vmatprep.subr.bf16.mxu0 0
    %908 = vmatpush1.bf16.msra.mxu0 0
    %909 = vmatprep.subr.bf16.mxu0 0
    %910 = vmatpush1.bf16.msra.mxu0 0
    %911 = vmatprep.subr.bf16.mxu0 0
    %912 = vmatpush1.bf16.msra.mxu0 0
    %913 = vmatprep.subr.bf16.mxu0 0
    %914 = vmatpush1.bf16.msra.mxu0 0
    %915 = vmatprep.subr.bf16.mxu0 0
    %916 = vmatpush1.bf16.msra.mxu0 0
    %917 = vmatprep.subr.bf16.mxu0 0
    %918 = vmatpush1.bf16.msra.mxu0 0
    %919 = vmatprep.subr.bf16.mxu0 0
    %920 = vmatpush1.bf16.msra.mxu0 0
    %921 = vmatprep.mubr.bf16.mxu0 0
    %922 = vmatmul.mubr.bf16.gmra.mrb[0].mxu0 %v326
    %v923 = vpop.f32.mrb[0].mxu0
    %v924 = vadd.f32 0.0, %v923
    %v925 = vpop.f32.mrb[0].mxu0
    %v926 = vpop.f32.mrb[0].mxu0
    %v927 = vadd.f32 0.0, %v926
    %v928 = vpop.f32.mrb[0].mxu0
    %929 = vmatprep.mubr.bf16.mxu0 0
    %930 = vmatmul.mubr.bf16.gmra.mrb[0].mxu0 %v327
    %v931 = vpop.f32.mrb[0].mxu0
    %v932 = vadd.f32 0.0, %v931
    %v933 = vpop.f32.mrb[0].mxu0
    %v934 = vpop.f32.mrb[0].mxu0
    %v935 = vadd.f32 0.0, %v934
    %v936 = vpop.f32.mrb[0].mxu0
    %937 = vmatprep.mubr.bf16.mxu0 0
    %938 = vmatmul.mubr.bf16.gmra.mrb[0].mxu0 %v328
    %v939 = vpop.f32.mrb[0].mxu0
    %v940 = vadd.f32 0.0, %v939
    %v941 = vpop.f32.mrb[0].mxu0
    %v942 = vpop.f32.mrb[0].mxu0
    %v943 = vadd.f32 0.0, %v942
    %v944 = vpop.f32.mrb[0].mxu0
    %945 = vmatprep.mubr.bf16.mxu0 0
    %946 = vmatmul.mubr.bf16.gmra.mrb[0].mxu0 %v329
    %v947 = vpop.f32.mrb[0].mxu0
    %v948 = vadd.f32 0.0, %v947
    %v949 = vpop.f32.mrb[0].mxu0
    %v950 = vpop.f32.mrb[0].mxu0
    %v951 = vadd.f32 0.0, %v950
    %v952 = vpop.f32.mrb[0].mxu0
    %953 = vmatprep.mubr.bf16.mxu0 0
    %954 = vmatmul.mubr.bf16.gmra.mrb[0].mxu0 %v330
    %v955 = vpop.f32.mrb[0].mxu0
    %v956 = vadd.f32 0.0, %v955
    %v957 = vpop.f32.mrb[0].mxu0
    %v958 = vpop.f32.mrb[0].mxu0
    %v959 = vadd.f32 0.0, %v958
    %v960 = vpop.f32.mrb[0].mxu0
    %961 = vmatprep.mubr.bf16.mxu0 0
    %962 = vmatmul.mubr.bf16.gmra.mrb[0].mxu0 %v331
    %v963 = vpop.f32.mrb[0].mxu0
    %v964 = vadd.f32 0.0, %v963
    %v965 = vpop.f32.mrb[0].mxu0
    %v966 = vpop.f32.mrb[0].mxu0
    %v967 = vadd.f32 0.0, %v966
    %v968 = vpop.f32.mrb[0].mxu0
    %969 = vmatprep.mubr.bf16.mxu0 0
    %970 = vmatmul.mubr.bf16.gmra.mrb[0].mxu0 %v332
    %v971 = vpop.f32.mrb[0].mxu0
    %v972 = vadd.f32 0.0, %v971
    %v973 = vpop.f32.mrb[0].mxu0
    %v974 = vpop.f32.mrb[0].mxu0
    %v975 = vadd.f32 0.0, %v974
    %v976 = vpop.f32.mrb[0].mxu0
    %977 = vmatprep.mubr.bf16.mxu0 0
    %978 = vmatmul.mubr.bf16.gmra.mrb[0].mxu0 %v333
    %v979 = vpop.f32.mrb[0].mxu0
    %v980 = vadd.f32 0.0, %v979
    %v981 = vpop.f32.mrb[0].mxu0
    %v982 = vpop.f32.mrb[0].mxu0
    %v983 = vadd.f32 0.0, %v982
    %v984 = vpop.f32.mrb[0].mxu0
    %985 = vdwg.mxu0
    %v986 = vmul.f32 %v924, %v310
    %v987 = vmul.f32 %v927, %v311
    %v988 = vmul.f32 %v932, %v312
    %v989 = vmul.f32 %v935, %v313
    %v990 = vmul.f32 %v940, %v314
    %v991 = vmul.f32 %v943, %v315
    %v992 = vmul.f32 %v948, %v316
    %v993 = vmul.f32 %v951, %v317
    %v994 = vmul.f32 %v956, %v318
    %v995 = vmul.f32 %v959, %v319
    %v996 = vmul.f32 %v964, %v320
    %v997 = vmul.f32 %v967, %v321
    %v998 = vmul.f32 %v972, %v322
    %v999 = vmul.f32 %v975, %v323
    %v1000 = vmul.f32 %v980, %v324
    %v1001 = vmul.f32 %v983, %v325
    %v1003 = vlaneseq
    %v1004 = vshrl.u32 %v1003, 7
    %v1005 = vsub.s32 0, %v1004
    %v1006 = vrot.slane %v711, %v1005
    %v1008 = vadd.f32 %v986, %v1006
    %v1009 = vadd.f32 %v987, %v1006
    %v1010 = vadd.f32 %v988, %v1006
    %v1011 = vadd.f32 %v989, %v1006
    %v1012 = vadd.f32 %v990, %v1006
    %v1013 = vadd.f32 %v991, %v1006
    %v1014 = vadd.f32 %v992, %v1006
    %v1015 = vadd.f32 %v993, %v1006
    %v1016 = vadd.f32 %v994, %v1006
    %v1017 = vadd.f32 %v995, %v1006
    %v1018 = vadd.f32 %v996, %v1006
    %v1019 = vadd.f32 %v997, %v1006
    %v1020 = vadd.f32 %v998, %v1006
    %v1021 = vadd.f32 %v999, %v1006
    %v1022 = vadd.f32 %v1000, %v1006
    %v1023 = vadd.f32 %v1001, %v1006
    %v1024 = vmax.f32 %v1008, 0.0
    %v1025 = vmax.f32 %v1009, 0.0
    %v1026 = vmax.f32 %v1010, 0.0
    %v1027 = vmax.f32 %v1011, 0.0
    %v1028 = vmax.f32 %v1012, 0.0
    %v1029 = vmax.f32 %v1013, 0.0
    %v1030 = vmax.f32 %v1014, 0.0
    %v1031 = vmax.f32 %v1015, 0.0
    %v1032 = vmax.f32 %v1016, 0.0
    %v1033 = vmax.f32 %v1017, 0.0
    %v1034 = vmax.f32 %v1018, 0.0
    %v1035 = vmax.f32 %v1019, 0.0
    %v1036 = vmax.f32 %v1020, 0.0
    %v1037 = vmax.f32 %v1021, 0.0
    %v1038 = vmax.f32 %v1022, 0.0
    %v1039 = vmax.f32 %v1023, 0.0
    %v1040 = vld [vmem:[#allocation10] sm:$0xf]
    %v1041 = vld [vmem:[#allocation10 + $0x4] sm:$0xf]
    %v1042 = vld [vmem:[#allocation10 + $0x8] sm:$0xf]
    %v1043 = vld [vmem:[#allocation10 + $0xc] sm:$0xf]
    %v1044 = vld [vmem:[#allocation10 + $0x10] sm:$0xf]
    %v1045 = vld [vmem:[#allocation10 + $0x14] sm:$0xf]
    %v1046 = vld [vmem:[#allocation10 + $0x18] sm:$0xf]
    %v1047 = vld [vmem:[#allocation10 + $0x1c] sm:$0xf]
    %v1048 = vld [vmem:[#allocation10 + $0x20] sm:$0xf]
    %v1049 = vld [vmem:[#allocation10 + $0x24] sm:$0xf]
    %v1050 = vld [vmem:[#allocation10 + $0x28] sm:$0xf]
    %v1051 = vld [vmem:[#allocation10 + $0x2c] sm:$0xf]
    %v1052 = vld [vmem:[#allocation10 + $0x30] sm:$0xf]
    %v1053 = vld [vmem:[#allocation10 + $0x34] sm:$0xf]
    %v1054 = vld [vmem:[#allocation10 + $0x38] sm:$0xf]
    %v1055 = vld [vmem:[#allocation10 + $0x3c] sm:$0xf]
    %v1056 = vld [vmem:[%s7] sm:$0x1]
    %v1057 = vmul.f32 %v1024, %v310
    %v1058 = vmul.f32 %v1025, %v311
    %v1059 = vmul.f32 %v1026, %v312
    %v1060 = vmul.f32 %v1027, %v313
    %v1061 = vmul.f32 %v1028, %v314
    %v1062 = vmul.f32 %v1029, %v315
    %v1063 = vmul.f32 %v1030, %v316
    %v1064 = vmul.f32 %v1031, %v317
    %v1065 = vmul.f32 %v1032, %v318
    %v1066 = vmul.f32 %v1033, %v319
    %v1067 = vmul.f32 %v1034, %v320
    %v1068 = vmul.f32 %v1035, %v321
    %v1069 = vmul.f32 %v1036, %v322
    %v1070 = vmul.f32 %v1037, %v323
    %v1071 = vmul.f32 %v1038, %v324
    %v1072 = vmul.f32 %v1039, %v325
    %v1073 = vpack.c.bf16 %v1058, %v1057
    %v1074 = vpack.c.bf16 %v1060, %v1059
    %v1075 = vpack.c.bf16 %v1062, %v1061
    %v1076 = vpack.c.bf16 %v1064, %v1063
    %v1077 = vpack.c.bf16 %v1066, %v1065
    %v1078 = vpack.c.bf16 %v1068, %v1067
    %v1079 = vpack.c.bf16 %v1070, %v1069
    %v1080 = vpack.c.bf16 %v1072, %v1071
    %v1097 = vunpack.c.l.b16 %v1040
    %v1098 = vunpack.c.l.b16 %v1041
    %v1099 = vunpack.c.l.b16 %v1042
    %v1100 = vunpack.c.l.b16 %v1043
    %v1101 = vunpack.c.l.b16 %v1044
    %v1102 = vunpack.c.l.b16 %v1045
    %v1103 = vunpack.c.l.b16 %v1046
    %v1104 = vunpack.c.l.b16 %v1047
    %v1105 = vunpack.c.l.b16 %v1048
    %v1106 = vunpack.c.l.b16 %v1049
    %v1107 = vunpack.c.l.b16 %v1050
    %v1108 = vunpack.c.l.b16 %v1051
    %v1109 = vunpack.c.l.b16 %v1052
    %v1110 = vunpack.c.l.b16 %v1053
    %v1111 = vunpack.c.l.b16 %v1054
    %v1112 = vunpack.c.l.b16 %v1055
    %v1113 = vpack.c.b16 %v1098, %v1097
    %v1114 = vpack.c.b16 %v1100, %v1099
    %v1115 = vpack.c.b16 %v1102, %v1101
    %v1116 = vpack.c.b16 %v1104, %v1103
    %v1117 = vpack.c.b16 %v1106, %v1105
    %v1118 = vpack.c.b16 %v1108, %v1107
    %v1119 = vpack.c.b16 %v1110, %v1109
    %v1120 = vpack.c.b16 %v1112, %v1111
    %1129 = vmatprep.subr.bf16.mxu0 0
    %1130 = vmatpush1.bf16.msra.mxu0 %v1113
    %1131 = vmatprep.subr.bf16.mxu0 0
    %1132 = vmatpush1.bf16.msra.mxu0 %v1114
    %1133 = vmatprep.subr.bf16.mxu0 0
    %1134 = vmatpush1.bf16.msra.mxu0 %v1115
    %1135 = vmatprep.subr.bf16.mxu0 0
    %1136 = vmatpush1.bf16.msra.mxu0 %v1116
    %1137 = vmatprep.subr.bf16.mxu0 0
    %1138 = vmatpush1.bf16.msra.mxu0 %v1117
    %1139 = vmatprep.subr.bf16.mxu0 0
    %1140 = vmatpush1.bf16.msra.mxu0 %v1118
    %1141 = vmatprep.subr.bf16.mxu0 0
    %1142 = vmatpush1.bf16.msra.mxu0 %v1119
    %1143 = vmatprep.subr.bf16.mxu0 0
    %1144 = vmatpush1.bf16.msra.mxu0 %v1120
    %1145 = vmatprep.subr.bf16.mxu0 0
    %1146 = vmatpush1.bf16.msra.mxu0 0
    %1147 = vmatprep.subr.bf16.mxu0 0
    %1148 = vmatpush1.bf16.msra.mxu0 0
    %1149 = vmatprep.subr.bf16.mxu0 0
    %1150 = vmatpush1.bf16.msra.mxu0 0
    %1151 = vmatprep.subr.bf16.mxu0 0
    %1152 = vmatpush1.bf16.msra.mxu0 0
    %1153 = vmatprep.subr.bf16.mxu0 0
    %1154 = vmatpush1.bf16.msra.mxu0 0
    %1155 = vmatprep.subr.bf16.mxu0 0
    %1156 = vmatpush1.bf16.msra.mxu0 0
    %1157 = vmatprep.subr.bf16.mxu0 0
    %1158 = vmatpush1.bf16.msra.mxu0 0
    %1159 = vmatprep.subr.bf16.mxu0 0
    %1160 = vmatpush1.bf16.msra.mxu0 0
    %1161 = vmatprep.mubr.bf16.mxu0 0
    %1162 = vmatmul.mubr.bf16.gmra.mrb[0].mxu0 %v1073
    %v1163 = vpop.f32.mrb[0].mxu0
    %v1164 = vadd.f32 0.0, %v1163
    %v1165 = vpop.f32.mrb[0].mxu0
    %v1166 = vpop.f32.mrb[0].mxu0
    %v1167 = vadd.f32 0.0, %v1166
    %v1168 = vpop.f32.mrb[0].mxu0
    %1169 = vmatprep.mubr.bf16.mxu0 0
    %1170 = vmatmul.mubr.bf16.gmra.mrb[0].mxu0 %v1074
    %v1171 = vpop.f32.mrb[0].mxu0
    %v1172 = vadd.f32 0.0, %v1171
    %v1173 = vpop.f32.mrb[0].mxu0
    %v1174 = vpop.f32.mrb[0].mxu0
    %v1175 = vadd.f32 0.0, %v1174
    %v1176 = vpop.f32.mrb[0].mxu0
    %1177 = vmatprep.mubr.bf16.mxu0 0
    %1178 = vmatmul.mubr.bf16.gmra.mrb[0].mxu0 %v1075
    %v1179 = vpop.f32.mrb[0].mxu0
    %v1180 = vadd.f32 0.0, %v1179
    %v1181 = vpop.f32.mrb[0].mxu0
    %v1182 = vpop.f32.mrb[0].mxu0
    %v1183 = vadd.f32 0.0, %v1182
    %v1184 = vpop.f32.mrb[0].mxu0
    %1185 = vmatprep.mubr.bf16.mxu0 0
    %1186 = vmatmul.mubr.bf16.gmra.mrb[0].mxu0 %v1076
    %v1187 = vpop.f32.mrb[0].mxu0
    %v1188 = vadd.f32 0.0, %v1187
    %v1189 = vpop.f32.mrb[0].mxu0
    %v1190 = vpop.f32.mrb[0].mxu0
    %v1191 = vadd.f32 0.0, %v1190
    %v1192 = vpop.f32.mrb[0].mxu0
    %1193 = vmatprep.mubr.bf16.mxu0 0
    %1194 = vmatmul.mubr.bf16.gmra.mrb[0].mxu0 %v1077
    %v1195 = vpop.f32.mrb[0].mxu0
    %v1196 = vadd.f32 0.0, %v1195
    %v1197 = vpop.f32.mrb[0].mxu0
    %v1198 = vpop.f32.mrb[0].mxu0
    %v1199 = vadd.f32 0.0, %v1198
    %v1200 = vpop.f32.mrb[0].mxu0
    %1201 = vmatprep.mubr.bf16.mxu0 0
    %1202 = vmatmul.mubr.bf16.gmra.mrb[0].mxu0 %v1078
    %v1203 = vpop.f32.mrb[0].mxu0
    %v1204 = vadd.f32 0.0, %v1203
    %v1205 = vpop.f32.mrb[0].mxu0
    %v1206 = vpop.f32.mrb[0].mxu0
    %v1207 = vadd.f32 0.0, %v1206
    %v1208 = vpop.f32.mrb[0].mxu0
    %1209 = vmatprep.mubr.bf16.mxu0 0
    %1210 = vmatmul.mubr.bf16.gmra.mrb[0].mxu0 %v1079
    %v1211 = vpop.f32.mrb[0].mxu0
    %v1212 = vadd.f32 0.0, %v1211
    %v1213 = vpop.f32.mrb[0].mxu0
    %v1214 = vpop.f32.mrb[0].mxu0
    %v1215 = vadd.f32 0.0, %v1214
    %v1216 = vpop.f32.mrb[0].mxu0
    %1217 = vmatprep.mubr.bf16.mxu0 0
    %1218 = vmatmul.mubr.bf16.gmra.mrb[0].mxu0 %v1080
    %v1219 = vpop.f32.mrb[0].mxu0
    %v1220 = vadd.f32 0.0, %v1219
    %v1221 = vpop.f32.mrb[0].mxu0
    %v1222 = vpop.f32.mrb[0].mxu0
    %v1223 = vadd.f32 0.0, %v1222
    %v1224 = vpop.f32.mrb[0].mxu0
    %1225 = vdwg.mxu0
    %v1226 = vpack.c.bf16 %v1167, %v1164
    %v1227 = vpack.c.bf16 %v1175, %v1172
    %v1228 = vpack.c.bf16 %v1183, %v1180
    %v1229 = vpack.c.bf16 %v1191, %v1188
    %v1230 = vpack.c.bf16 %v1199, %v1196
    %v1231 = vpack.c.bf16 %v1207, %v1204
    %v1232 = vpack.c.bf16 %v1215, %v1212
    %v1233 = vpack.c.bf16 %v1223, %v1220
    %1234 = vmatprep.subr.bf16.mxu0 0
    %1235 = vmatpush1.bf16.msra.mxu0 %v1226
    %1236 = vmatprep.subr.bf16.mxu0 0
    %1237 = vmatpush1.bf16.msra.mxu0 %v1227
    %1238 = vmatprep.subr.bf16.mxu0 0
    %1239 = vmatpush1.bf16.msra.mxu0 %v1228
    %1240 = vmatprep.subr.bf16.mxu0 0
    %1241 = vmatpush1.bf16.msra.mxu0 %v1229
    %1242 = vmatprep.subr.bf16.mxu0 0
    %1243 = vmatpush1.bf16.msra.mxu0 %v1230
    %1244 = vmatprep.subr.bf16.mxu0 0
    %1245 = vmatpush1.bf16.msra.mxu0 %v1231
    %1246 = vmatprep.subr.bf16.mxu0 0
    %1247 = vmatpush1.bf16.msra.mxu0 %v1232
    %1248 = vmatprep.subr.bf16.mxu0 0
    %1249 = vmatpush1.bf16.msra.mxu0 %v1233
    %1250 = vmatprep.subr.bf16.mxu0 0
    %1251 = vmatpush1.bf16.msra.mxu0 0
    %1252 = vmatprep.subr.bf16.mxu0 0
    %1253 = vmatpush1.bf16.msra.mxu0 0
    %1254 = vmatprep.subr.bf16.mxu0 0
    %1255 = vmatpush1.bf16.msra.mxu0 0
    %1256 = vmatprep.subr.bf16.mxu0 0
    %1257 = vmatpush1.bf16.msra.mxu0 0
    %1258 = vmatprep.subr.bf16.mxu0 0
    %1259 = vmatpush1.bf16.msra.mxu0 0
    %1260 = vmatprep.subr.bf16.mxu0 0
    %1261 = vmatpush1.bf16.msra.mxu0 0
    %1262 = vmatprep.subr.bf16.mxu0 0
    %1263 = vmatpush1.bf16.msra.mxu0 0
    %1264 = vmatprep.subr.bf16.mxu0 0
    %1265 = vmatpush1.bf16.msra.mxu0 0
    %1266 = vmatprep.mubr.bf16.mxu0 0
    %1267 = vmatmul.mubr.bf16.gmra.mrb[0].mxu0 %v326
    %v1268 = vpop.f32.mrb[0].mxu0
    %v1269 = vadd.f32 0.0, %v1268
    %v1270 = vpop.f32.mrb[0].mxu0
    %v1271 = vpop.f32.mrb[0].mxu0
    %v1272 = vadd.f32 0.0, %v1271
    %v1273 = vpop.f32.mrb[0].mxu0
    %1274 = vmatprep.mubr.bf16.mxu0 0
    %1275 = vmatmul.mubr.bf16.gmra.mrb[0].mxu0 %v327
    %v1276 = vpop.f32.mrb[0].mxu0
    %v1277 = vadd.f32 0.0, %v1276
    %v1278 = vpop.f32.mrb[0].mxu0
    %v1279 = vpop.f32.mrb[0].mxu0
    %v1280 = vadd.f32 0.0, %v1279
    %v1281 = vpop.f32.mrb[0].mxu0
    %1282 = vmatprep.mubr.bf16.mxu0 0
    %1283 = vmatmul.mubr.bf16.gmra.mrb[0].mxu0 %v328
    %v1284 = vpop.f32.mrb[0].mxu0
    %v1285 = vadd.f32 0.0, %v1284
    %v1286 = vpop.f32.mrb[0].mxu0
    %v1287 = vpop.f32.mrb[0].mxu0
    %v1288 = vadd.f32 0.0, %v1287
    %v1289 = vpop.f32.mrb[0].mxu0
    %1290 = vmatprep.mubr.bf16.mxu0 0
    %1291 = vmatmul.mubr.bf16.gmra.mrb[0].mxu0 %v329
    %v1292 = vpop.f32.mrb[0].mxu0
    %v1293 = vadd.f32 0.0, %v1292
    %v1294 = vpop.f32.mrb[0].mxu0
    %v1295 = vpop.f32.mrb[0].mxu0
    %v1296 = vadd.f32 0.0, %v1295
    %v1297 = vpop.f32.mrb[0].mxu0
    %1298 = vmatprep.mubr.bf16.mxu0 0
    %1299 = vmatmul.mubr.bf16.gmra.mrb[0].mxu0 %v330
    %v1300 = vpop.f32.mrb[0].mxu0
    %v1301 = vadd.f32 0.0, %v1300
    %v1302 = vpop.f32.mrb[0].mxu0
    %v1303 = vpop.f32.mrb[0].mxu0
    %v1304 = vadd.f32 0.0, %v1303
    %v1305 = vpop.f32.mrb[0].mxu0
    %1306 = vmatprep.mubr.bf16.mxu0 0
    %1307 = vmatmul.mubr.bf16.gmra.mrb[0].mxu0 %v331
    %v1308 = vpop.f32.mrb[0].mxu0
    %v1309 = vadd.f32 0.0, %v1308
    %v1310 = vpop.f32.mrb[0].mxu0
    %v1311 = vpop.f32.mrb[0].mxu0
    %v1312 = vadd.f32 0.0, %v1311
    %v1313 = vpop.f32.mrb[0].mxu0
    %1314 = vmatprep.mubr.bf16.mxu0 0
    %1315 = vmatmul.mubr.bf16.gmra.mrb[0].mxu0 %v332
    %v1316 = vpop.f32.mrb[0].mxu0
    %v1317 = vadd.f32 0.0, %v1316
    %v1318 = vpop.f32.mrb[0].mxu0
    %v1319 = vpop.f32.mrb[0].mxu0
    %v1320 = vadd.f32 0.0, %v1319
    %v1321 = vpop.f32.mrb[0].mxu0
    %1322 = vmatprep.mubr.bf16.mxu0 0
    %1323 = vmatmul.mubr.bf16.gmra.mrb[0].mxu0 %v333
    %v1324 = vpop.f32.mrb[0].mxu0
    %v1325 = vadd.f32 0.0, %v1324
    %v1326 = vpop.f32.mrb[0].mxu0
    %v1327 = vpop.f32.mrb[0].mxu0
    %v1328 = vadd.f32 0.0, %v1327
    %v1329 = vpop.f32.mrb[0].mxu0
    %1330 = vdwg.mxu0
    %v1331 = vmul.f32 %v1269, %v310
    %v1332 = vmul.f32 %v1272, %v311
    %v1333 = vmul.f32 %v1277, %v312
    %v1334 = vmul.f32 %v1280, %v313
    %v1335 = vmul.f32 %v1285, %v314
    %v1336 = vmul.f32 %v1288, %v315
    %v1337 = vmul.f32 %v1293, %v316
    %v1338 = vmul.f32 %v1296, %v317
    %v1339 = vmul.f32 %v1301, %v318
    %v1340 = vmul.f32 %v1304, %v319
    %v1341 = vmul.f32 %v1309, %v320
    %v1342 = vmul.f32 %v1312, %v321
    %v1343 = vmul.f32 %v1317, %v322
    %v1344 = vmul.f32 %v1320, %v323
    %v1345 = vmul.f32 %v1325, %v324
    %v1346 = vmul.f32 %v1328, %v325
    %v1348 = vlaneseq
    %v1349 = vshrl.u32 %v1348, 7
    %v1350 = vsub.s32 0, %v1349
    %v1351 = vrot.slane %v1056, %v1350
    %v1353 = vadd.f32 %v1331, %v1351
    %v1354 = vadd.f32 %v1332, %v1351
    %v1355 = vadd.f32 %v1333, %v1351
    %v1356 = vadd.f32 %v1334, %v1351
    %v1357 = vadd.f32 %v1335, %v1351
    %v1358 = vadd.f32 %v1336, %v1351
    %v1359 = vadd.f32 %v1337, %v1351
    %v1360 = vadd.f32 %v1338, %v1351
    %v1361 = vadd.f32 %v1339, %v1351
    %v1362 = vadd.f32 %v1340, %v1351
    %v1363 = vadd.f32 %v1341, %v1351
    %v1364 = vadd.f32 %v1342, %v1351
    %v1365 = vadd.f32 %v1343, %v1351
    %v1366 = vadd.f32 %v1344, %v1351
    %v1367 = vadd.f32 %v1345, %v1351
    %v1368 = vadd.f32 %v1346, %v1351
    %1369 = vst [vmem:[#allocation11] sm:$0xff] %v1353
    %1370 = vst [vmem:[#allocation11 + $0x8] sm:$0xff] %v1354
    %1371 = vst [vmem:[#allocation11 + $0x10] sm:$0xff] %v1355
    %1372 = vst [vmem:[#allocation11 + $0x18] sm:$0xff] %v1356
    %1373 = vst [vmem:[#allocation11 + $0x20] sm:$0xff] %v1357
    %1374 = vst [vmem:[#allocation11 + $0x28] sm:$0xff] %v1358
    %1375 = vst [vmem:[#allocation11 + $0x30] sm:$0xff] %v1359
    %1376 = vst [vmem:[#allocation11 + $0x38] sm:$0xff] %v1360
    %1377 = vst [vmem:[#allocation11 + $0x40] sm:$0xff] %v1361
    %1378 = vst [vmem:[#allocation11 + $0x48] sm:$0xff] %v1362
    %1379 = vst [vmem:[#allocation11 + $0x50] sm:$0xff] %v1363
    %1380 = vst [vmem:[#allocation11 + $0x58] sm:$0xff] %v1364
    %1381 = vst [vmem:[#allocation11 + $0x60] sm:$0xff] %v1365
    %1382 = vst [vmem:[#allocation11 + $0x68] sm:$0xff] %v1366
    %1383 = vst [vmem:[#allocation11 + $0x70] sm:$0xff] %v1367
    %1384 = vst [vmem:[#allocation11 + $0x78] sm:$0xff] %v1368
    // Predicated region
    $region54: #{tpu_custom_call.1} parent=1 // pred_check
      _
    $region55: #{tpu_custom_call.1} parent=1 // pred_check_branch
      %1386 = sbr.rel (0) target = $region57
    $region56: #{tpu_custom_call.1} parent=1 // pred_region
      %s1388 = ssub.s32 2048, 2048
      %1389 = vsyncadd [#allocation4], %s1388
      %s1390 = sshll.u32 [#allocation11], 4
      %s1391 = int_to_ptr.vmem [resolvable:$true] %s1390
      %1396 = dma.vmem_to_hbm [thread:$0]  %s1391, 2048, %s8, [#allocation4], 128, 128, 8
    $region57: #{tpu_custom_call.1} parent=1 // pred_fallthru
      _
    // Predicated region
    $region58: #{tpu_custom_call.1} parent=1 // pred_check
      _
    $region59: #{tpu_custom_call.1} parent=1 // pred_check_branch
      %1398 = sbr.rel (0) target = $region61
    $region60: #{tpu_custom_call.1} parent=1 // pred_region
      %1399 = dma.done [#allocation4], 2048
    $region61: #{tpu_custom_call.1} parent=1 // pred_fallthru
      _
    %1400 = vsyncpa [#allocation3], 1
    %1401 = vsyncpa [#allocation6], 1
    %1402 = vsyncpa [#allocation9], 1
    %1403 = vsyncpa [#allocation4], 1

</llo_original>
